<compile_context>
chip_gen: v7x
topology: tpu7x:2x2x1
jax: 0.10.0
libtpu: 0.0.40
codegen_flags: <defaults>
</compile_context>

<pallas_src>
import functools

import jax
import jax.numpy as jnp
from jax import lax
from jax.experimental import pallas as pl
from jax.experimental.pallas import tpu as pltpu


def _self_attention_kernel(x_ref, wqkv_ref, bqkv_ref, o_ref, *, hw):
    # x_ref / o_ref block: (C, block_n*HW)  (lane-dense)
    C, bhw = x_ref.shape
    nb = bhw // hw

    x = x_ref[...]                                      # (C, nb*HW) fp32
    w = wqkv_ref[...].astype(jnp.bfloat16)              # (3C, C)
    bias = bqkv_ref[...]                                 # (3C, 1) fp32

    # Fused Q/K/V projection for the whole block: one (3C, C) x (C, nb*HW)
    # MXU pass, bf16 inputs, fp32 accumulation, single broadcast bias add.
    qkv = jnp.dot(w, x.astype(jnp.bfloat16),
                  preferred_element_type=jnp.float32) + bias      # (3C, nb*HW)

    q_all = qkv[:C, :]
    k_all = qkv[C:2 * C, :]
    v_all = qkv[2 * C:, :]

    # Per-batch attention: two (HW, HW)-sized MXU matmuls + fp32 softmax.  The
    # loop is a small static unroll; each iteration stores its output slab
    # before the next starts, so only ~one (HW, HW) score matrix needs to be
    # live at a time (the wrapper still budgets VMEM conservatively).
    for i in range(nb):
        sl = slice(i * hw, (i + 1) * hw)                 # static, 128-aligned
        q = q_all[:, sl].astype(jnp.bfloat16)            # (C, HW)
        k = k_all[:, sl].astype(jnp.bfloat16)            # (C, HW)
        v = v_all[:, sl].astype(jnp.bfloat16)            # (C, HW)

        # att[a, b] = sum_c k[c, a] * q[c, b]   (bf16 MXU inputs, fp32 acc)
        att = lax.dot_general(k, q, (((0,), (0,)), ((), ())),
                              preferred_element_type=jnp.float32)  # (HW, HW)

        # softmax over the last axis (fp32 reductions, EUP reciprocal).
        att = att - jnp.max(att, axis=-1, keepdims=True)
        p = jnp.exp(att)
        p = p * pl.reciprocal(jnp.sum(p, axis=-1, keepdims=True), approx=True)

        # out[c, a] = sum_j v[c, j] * p[j, a]   (gamma already folded into v)
        out = jnp.dot(v, p.astype(jnp.bfloat16),
                      preferred_element_type=jnp.float32)           # (C, HW)

        o_ref[:, sl] = (out + x[:, sl]).astype(o_ref.dtype)


def _vmem_capacity_bytes():
    """Physical VMEM of the local chip; conservative 64 MiB fallback (v7x)."""
    try:
        return int(pltpu.get_tpu_info().vmem_capacity_bytes)
    except Exception:
        return 64 * 1024 * 1024


def _cores_per_chip():
    """2 TensorCores on v7x, 1 on v5e/v6e (conservative default: 1)."""
    try:
        kind = jax.devices()[0].device_kind.lower()
        if "v7" in kind:
            return 2
    except Exception:
        pass
    return 1


def _per_batch_vmem_bytes(C, HW):
    f32 = 4
    return (2 * 2 * C * HW * f32        # double-buffered x and out slabs
            + 2 * 3 * C * HW * f32      # qkv fp32 + bf16 working copies
            + 3 * HW * HW * f32)        # att fp32, p fp32, p bf16 (+ slack)


def _pick_block_n(N, C, HW, vmem_cap, cores):
    """Batch elements per grid step, sized from the VMEM budget."""
    budget = int(0.6 * vmem_cap)
    max_b = max(1, budget // _per_batch_vmem_bytes(C, HW))
    # v7x: keep at least 2 grid steps so both TensorCores get work.
    if cores >= 2 and N >= 2:
        max_b = min(max_b, N // 2)
    max_b = max(1, min(max_b, N))
    for cand in range(max_b, 0, -1):     # largest divisor of N <= max_b
        if N % cand == 0:
            return cand
    return 1


def self_attention_pallas(x_nchw, wq, bq, wk, bk, wv, bv, gamma, *, block_n=None):
    """x_nchw: (N, C, H, W) float32.  Weights: (C, C), biases: (C,), gamma: scalar."""
    N, C, H, W = x_nchw.shape
    HW = H * W

    # Lane-dense layout: (C, N*HW), so each block is a wide, dense slab.
    x2 = x_nchw.reshape(N, C, HW).transpose(1, 0, 2).reshape(C, N * HW)

    gamma_f = jnp.asarray(gamma, jnp.float32)
    # Fold gamma into the V projection: gamma*(V P) == ((gamma*Wv)x + gamma*bv) P.
    wqkv = jnp.concatenate([wq, wk, gamma_f * wv], axis=0).astype(jnp.float32)
    bqkv = jnp.concatenate([bq, bk, gamma_f * bv],
                           axis=0).reshape(3 * C, 1).astype(jnp.float32)

    vmem_cap = _vmem_capacity_bytes()
    cores = _cores_per_chip()
    if block_n is None:
        block_n = _pick_block_n(N, C, HW, vmem_cap, cores)
    assert N % block_n == 0
    grid = (N // block_n,)

    # Conservative VMEM estimate (counts every batch element's score
    # intermediates as live) with headroom, clamped to 0.8x physical VMEM.
    f32 = 4
    params = 2 * (3 * C * C + 3 * C) * f32
    est = block_n * _per_batch_vmem_bytes(C, HW) + params
    vmem_limit = int(min(max(int(1.5 * est), 32 * 1024 * 1024),
                         int(0.8 * vmem_cap)))

    kernel = functools.partial(_self_attention_kernel, hw=HW)

    out2 = pl.pallas_call(
        kernel,
        out_shape=jax.ShapeDtypeStruct((C, N * HW), x_nchw.dtype),
        grid_spec=pltpu.PrefetchScalarGridSpec(
            num_scalar_prefetch=0,
            grid=grid,
            in_specs=[
                pl.BlockSpec((C, block_n * HW), lambda n: (0, n)),   # x (lane-dense)
                pl.BlockSpec((3 * C, C), lambda n: (0, 0)),          # fused Wqkv
                pl.BlockSpec((3 * C, 1), lambda n: (0, 0)),          # fused bias
            ],
            out_specs=pl.BlockSpec((C, block_n * HW), lambda n: (0, n)),
        ),
        compiler_params=pltpu.CompilerParams(
            dimension_semantics=("parallel",),
            vmem_limit_bytes=vmem_limit,
        ),
    )(x2, wqkv, bqkv)

    return out2.reshape(C, N, HW).transpose(1, 0, 2).reshape(N, C, H, W)


def _reference(x_nchw, wq, bq, wk, bk, wv, bv, gamma):
    """Plain-JAX fp32 reference mirroring the original forward exactly."""
    N, C, H, W = x_nchw.shape
    HW = H * W
    x = x_nchw.reshape(N, C, HW)
    q = jnp.einsum('oc,ncp->nop', wq, x) + bq[None, :, None]   # (N, C, HW)
    k = jnp.einsum('oc,ncp->nop', wk, x) + bk[None, :, None]
    v = jnp.einsum('oc,ncp->nop', wv, x) + bv[None, :, None]
    att = jnp.einsum('nci,ncj->nij', k, q)                     # bmm(key^T, query)
    att = jax.nn.softmax(att, axis=-1)
    out = jnp.einsum('ncj,nji->nci', v, att)                   # bmm(value, attention)
    out = gamma * out + x
    return out.reshape(N, C, H, W)


if __name__ == "__main__":
    key = jax.random.PRNGKey(0)
    N, C, H, W = 2, 4, 16, 16   # small shapes consistent with the module

    k_x, k_wq, k_bq, k_wk, k_bk, k_wv, k_bv = jax.random.split(key, 7)
    x = jax.random.normal(k_x, (N, C, H, W), dtype=jnp.float32)

    # Conv2d(C, C, kernel_size=1) weights: (C, C, 1, 1) in torch -> squeeze to (C, C).
    scale = 1.0 / (C ** 0.5)
    wq = jax.random.uniform(k_wq, (C, C), jnp.float32, -scale, scale)
    bq = jax.random.uniform(k_bq, (C,), jnp.float32, -scale, scale)
    wk = jax.random.uniform(k_wk, (C, C), jnp.float32, -scale, scale)
    bk = jax.random.uniform(k_bk, (C,), jnp.float32, -scale, scale)
    wv = jax.random.uniform(k_wv, (C, C), jnp.float32, -scale, scale)
    bv = jax.random.uniform(k_bv, (C,), jnp.float32, -scale, scale)
    # PyTorch initializes gamma to 0; use a nonzero deterministic value so the
    # attention path actually contributes to the output.
    gamma = jnp.float32(0.5)

    out = jax.block_until_ready(
        self_attention_pallas(x, wq, bq, wk, bk, wv, bv, gamma))

    ref = _reference(x, wq, bq, wk, bk, wv, bv, gamma)
    assert out.shape == (N, C, H, W)
    # Tolerance accounts for bf16 MXU inputs on the projection and on the two
    # (HW, HW) matmuls, plus the approximate EUP reciprocal in the softmax.
    assert jnp.allclose(out, ref, atol=3e-2, rtol=3e-2), \
        f"max abs err {jnp.max(jnp.abs(out - ref))}"

    print("KERNEL_OK")
</pallas_src>

<mosaic_0001>
module attributes {stable_mosaic.version = 11 : i64} {
  func.func @_self_attention_kernel(%arg0: i32, %arg1: memref<4x512xf32, #tpu.memory_space<vmem>>, %arg2: memref<12x4xf32, #tpu.memory_space<vmem>>, %arg3: memref<12x1xf32, #tpu.memory_space<vmem>>, %arg4: memref<4x512xf32, #tpu.memory_space<vmem>>) attributes {dimension_semantics = [#tpu.dimension_semantics<parallel>], iteration_bounds = array<i64: 1>, scalar_prefetch = 0 : i64, scratch_operands = 0 : i64, tpu.core_type = #tpu.core_type<tc>, window_params = [{transform_indices = @transform_0, window_bounds = array<i64: 4, 512>}, {pipeline_mode = #tpu.pipeline_mode<synchronous>, transform_indices = @transform_1, window_bounds = array<i64: 12, 4>}, {pipeline_mode = #tpu.pipeline_mode<synchronous>, transform_indices = @transform_2, window_bounds = array<i64: 12, 1>}, {transform_indices = @transform_3, window_bounds = array<i64: 4, 512>}]} {
    %c0 = arith.constant 0 : index
    %c0_0 = arith.constant 0 : index
    %0 = vector.load %arg1[%c0, %c0_0] : memref<4x512xf32, #tpu.memory_space<vmem>>, vector<4x512xf32>
    %c0_1 = arith.constant 0 : index
    %c0_2 = arith.constant 0 : index
    %1 = vector.load %arg2[%c0_1, %c0_2] : memref<12x4xf32, #tpu.memory_space<vmem>>, vector<12x4xf32>
    %2 = arith.truncf %1 : vector<12x4xf32> to vector<12x4xbf16>
    %c0_3 = arith.constant 0 : index
    %c0_4 = arith.constant 0 : index
    %3 = vector.load %arg3[%c0_3, %c0_4] : memref<12x1xf32, #tpu.memory_space<vmem>>, vector<12x1xf32>
    %4 = arith.truncf %0 : vector<4x512xf32> to vector<4x512xbf16>
    %cst = arith.constant dense<0.000000e+00> : vector<12x512xf32>
    %5 = tpu.matmul %2, %4, %cst {dimension_numbers = #tpu.dot_dimension_numbers<[1], [0], [0], [1], [0, 0, 1, 1], [], []>} : vector<12x4xbf16>, vector<4x512xbf16>, vector<12x512xf32> -> vector<12x512xf32>
    %6 = vector.broadcast %3 : vector<12x1xf32> to vector<12x512xf32>
    %7 = arith.addf %5, %6 : vector<12x512xf32>
    %8 = vector.extract_strided_slice %7 {offsets = [0, 0], sizes = [4, 512], strides = [1, 1]} : vector<12x512xf32> to vector<4x512xf32>
    %9 = vector.extract_strided_slice %7 {offsets = [4, 0], sizes = [4, 512], strides = [1, 1]} : vector<12x512xf32> to vector<4x512xf32>
    %10 = vector.extract_strided_slice %7 {offsets = [8, 0], sizes = [4, 512], strides = [1, 1]} : vector<12x512xf32> to vector<4x512xf32>
    %11 = vector.extract_strided_slice %8 {offsets = [0, 0], sizes = [4, 256], strides = [1, 1]} : vector<4x512xf32> to vector<4x256xf32>
    %12 = arith.truncf %11 : vector<4x256xf32> to vector<4x256xbf16>
    %13 = vector.extract_strided_slice %9 {offsets = [0, 0], sizes = [4, 256], strides = [1, 1]} : vector<4x512xf32> to vector<4x256xf32>
    %14 = arith.truncf %13 : vector<4x256xf32> to vector<4x256xbf16>
    %15 = vector.extract_strided_slice %10 {offsets = [0, 0], sizes = [4, 256], strides = [1, 1]} : vector<4x512xf32> to vector<4x256xf32>
    %16 = arith.truncf %15 : vector<4x256xf32> to vector<4x256xbf16>
    %cst_5 = arith.constant dense<0.000000e+00> : vector<256x256xf32>
    %17 = tpu.matmul %14, %12, %cst_5 {dimension_numbers = #tpu.dot_dimension_numbers<[0], [0], [1], [1], [0, 1, 1, 1], [], []>} : vector<4x256xbf16>, vector<4x256xbf16>, vector<256x256xf32> -> vector<256x256xf32>
    %cst_6 = arith.constant dense<0xFF800000> : vector<256xf32>
    %18 = vector.multi_reduction <maximumf>, %17, %cst_6 [1] : vector<256x256xf32> to vector<256xf32>
    %19 = vector.shape_cast %18 : vector<256xf32> to vector<256x1xf32>
    %20 = vector.broadcast %19 : vector<256x1xf32> to vector<256x256xf32>
    %21 = arith.subf %17, %20 : vector<256x256xf32>
    %22 = math.exp %21 : vector<256x256xf32>
    %cst_7 = arith.constant dense<0.000000e+00> : vector<256xf32>
    %23 = vector.multi_reduction <add>, %22, %cst_7 [1] : vector<256x256xf32> to vector<256xf32>
    %24 = vector.shape_cast %23 : vector<256xf32> to vector<256x1xf32>
    %25 = tpu.reciprocal %24 {approx = true} : vector<256x1xf32> -> vector<256x1xf32>
    %26 = vector.broadcast %25 : vector<256x1xf32> to vector<256x256xf32>
    %27 = arith.mulf %22, %26 : vector<256x256xf32>
    %28 = arith.truncf %27 : vector<256x256xf32> to vector<256x256xbf16>
    %cst_8 = arith.constant dense<0.000000e+00> : vector<4x256xf32>
    %29 = tpu.matmul %16, %28, %cst_8 {dimension_numbers = #tpu.dot_dimension_numbers<[1], [0], [0], [1], [0, 0, 1, 1], [], []>} : vector<4x256xbf16>, vector<256x256xbf16>, vector<4x256xf32> -> vector<4x256xf32>
    %30 = vector.extract_strided_slice %0 {offsets = [0, 0], sizes = [4, 256], strides = [1, 1]} : vector<4x512xf32> to vector<4x256xf32>
    %31 = arith.addf %29, %30 : vector<4x256xf32>
    %c0_9 = arith.constant 0 : index
    %c0_10 = arith.constant 0 : index
    %32 = vector.load %arg4[%c0_9, %c0_10] : memref<4x512xf32, #tpu.memory_space<vmem>>, vector<4x256xf32>
    tpu.vector_store %arg4[%c0_9, %c0_10], %31 {strides = array<i32>} : memref<4x512xf32, #tpu.memory_space<vmem>>, vector<4x256xf32>,
    %33 = vector.extract_strided_slice %8 {offsets = [0, 256], sizes = [4, 256], strides = [1, 1]} : vector<4x512xf32> to vector<4x256xf32>
    %34 = arith.truncf %33 : vector<4x256xf32> to vector<4x256xbf16>
    %35 = vector.extract_strided_slice %9 {offsets = [0, 256], sizes = [4, 256], strides = [1, 1]} : vector<4x512xf32> to vector<4x256xf32>
    %36 = arith.truncf %35 : vector<4x256xf32> to vector<4x256xbf16>
    %37 = vector.extract_strided_slice %10 {offsets = [0, 256], sizes = [4, 256], strides = [1, 1]} : vector<4x512xf32> to vector<4x256xf32>
    %38 = arith.truncf %37 : vector<4x256xf32> to vector<4x256xbf16>
    %cst_11 = arith.constant dense<0.000000e+00> : vector<256x256xf32>
    %39 = tpu.matmul %36, %34, %cst_11 {dimension_numbers = #tpu.dot_dimension_numbers<[0], [0], [1], [1], [0, 1, 1, 1], [], []>} : vector<4x256xbf16>, vector<4x256xbf16>, vector<256x256xf32> -> vector<256x256xf32>
    %cst_12 = arith.constant dense<0xFF800000> : vector<256xf32>
    %40 = vector.multi_reduction <maximumf>, %39, %cst_12 [1] : vector<256x256xf32> to vector<256xf32>
    %41 = vector.shape_cast %40 : vector<256xf32> to vector<256x1xf32>
    %42 = vector.broadcast %41 : vector<256x1xf32> to vector<256x256xf32>
    %43 = arith.subf %39, %42 : vector<256x256xf32>
    %44 = math.exp %43 : vector<256x256xf32>
    %cst_13 = arith.constant dense<0.000000e+00> : vector<256xf32>
    %45 = vector.multi_reduction <add>, %44, %cst_13 [1] : vector<256x256xf32> to vector<256xf32>
    %46 = vector.shape_cast %45 : vector<256xf32> to vector<256x1xf32>
    %47 = tpu.reciprocal %46 {approx = true} : vector<256x1xf32> -> vector<256x1xf32>
    %48 = vector.broadcast %47 : vector<256x1xf32> to vector<256x256xf32>
    %49 = arith.mulf %44, %48 : vector<256x256xf32>
    %50 = arith.truncf %49 : vector<256x256xf32> to vector<256x256xbf16>
    %cst_14 = arith.constant dense<0.000000e+00> : vector<4x256xf32>
    %51 = tpu.matmul %38, %50, %cst_14 {dimension_numbers = #tpu.dot_dimension_numbers<[1], [0], [0], [1], [0, 0, 1, 1], [], []>} : vector<4x256xbf16>, vector<256x256xbf16>, vector<4x256xf32> -> vector<4x256xf32>
    %52 = vector.extract_strided_slice %0 {offsets = [0, 256], sizes = [4, 256], strides = [1, 1]} : vector<4x512xf32> to vector<4x256xf32>
    %53 = arith.addf %51, %52 : vector<4x256xf32>
    %c0_15 = arith.constant 0 : index
    %c256 = arith.constant 256 : index
    %54 = vector.load %arg4[%c0_15, %c256] : memref<4x512xf32, #tpu.memory_space<vmem>>, vector<4x256xf32>
    tpu.vector_store %arg4[%c0_15, %c256], %53 {strides = array<i32>} : memref<4x512xf32, #tpu.memory_space<vmem>>, vector<4x256xf32>,
    return
  }
  func.func @transform_0(%arg0: i32) -> (i32, i32) {
    %c0_i32 = arith.constant 0 : i32
    %c0_i32_0 = arith.constant 0 : i32
    return %c0_i32, %arg0 : i32, i32
  }
  func.func @transform_1(%arg0: i32) -> (i32, i32) {
    %c0_i32 = arith.constant 0 : i32
    %c0_i32_0 = arith.constant 0 : i32
    %c0_i32_1 = arith.constant 0 : i32
    return %c0_i32, %c0_i32_0 : i32, i32
  }
  func.func @transform_2(%arg0: i32) -> (i32, i32) {
    %c0_i32 = arith.constant 0 : i32
    %c0_i32_0 = arith.constant 0 : i32
    %c0_i32_1 = arith.constant 0 : i32
    return %c0_i32, %c0_i32_0 : i32, i32
  }
  func.func @transform_3(%arg0: i32) -> (i32, i32) {
    %c0_i32 = arith.constant 0 : i32
    %c0_i32_0 = arith.constant 0 : i32
    return %c0_i32, %arg0 : i32, i32
  }
}

</mosaic_0001>

<llo_original>
// kernel: tpu_custom_call.1
$region0: #{tpu_custom_call.1}
  #allocation0 [shape = 'u32[]', space=smem, size = 0x4, offset = 0x4, fixed_abs, tag = 'smem constant byte address 0x4 - core index']
  #allocation1 [shape = 'u32[144,128]{1,0:T(1,128)}', space=vmem, size = 0x12000, scoped, tag = 'internal scratch']
  %s0 = inlined_call_operand.vmem [shape: f32[4,512], index: 0, kind: input, shape index: {}]
  %s1 = inlined_call_operand.vmem [shape: f32[12,4], index: 1, kind: input, shape index: {}]
  %s2 = inlined_call_operand.vmem [shape: f32[12,1], index: 2, kind: input, shape index: {}]
  %s3 = inlined_call_operand.hbm [shape: f32[4,512], index: 3, kind: output, shape index: {}]
  %s4 = sld [smem:[#allocation0]]
  $region22: #{tpu_custom_call.1} parent=0
    _
  %s6 = ssub.s32 1, %s4
  %s7 = scalar_select 0, %s6, %s4
  $region1: #{tpu_custom_call.1} parent=0
    #allocation2 [shape = 'u8[8192]{0}', space=vmem, size = 0x2000, scoped, tag = 'output window, operand 0, single buffered']
    #allocation3 [shape = 's32[1]{0}', space=sflag, size = 0x4, scoped, tag = 'scoped memory for tpu_custom_call.1']
    %8 = vsyncpa [#allocation3], 0
    // Predicated region
    $region2: #{tpu_custom_call.1} parent=1 // pred_check
      _
    $region3: #{tpu_custom_call.1} parent=1 // pred_check_branch
      %10 = sbr.rel (0) target = $region5
    $region4: #{tpu_custom_call.1} parent=1 // pred_region
      _
    $region5: #{tpu_custom_call.1} parent=1 // pred_fallthru
      _
    // Predicated region
    $region6: #{tpu_custom_call.1} parent=1 // pred_check
      _
    $region7: #{tpu_custom_call.1} parent=1 // pred_check_branch
      %12 = sbr.rel (0) target = $region9
    $region8: #{tpu_custom_call.1} parent=1 // pred_region
      _
    $region9: #{tpu_custom_call.1} parent=1 // pred_fallthru
      _
    // Predicated region
    $region10: #{tpu_custom_call.1} parent=1 // pred_check
      _
    $region11: #{tpu_custom_call.1} parent=1 // pred_check_branch
      %14 = sbr.rel (0) target = $region13
    $region12: #{tpu_custom_call.1} parent=1 // pred_region
      _
    $region13: #{tpu_custom_call.1} parent=1 // pred_fallthru
      _
    %v16 = vld [vmem:[%s0] sm:$0xff]
    %v17 = vld [vmem:[%s0 + $0x8] sm:$0xff]
    %v18 = vld [vmem:[%s1] sm:$0xff]
    %v19 = vld [vmem:[%s1 + $0x8] sm:$0xf]
    %v20 = vpack.c.bf16 %v19, %v18
    %v21 = vld [vmem:[%s2] sm:$0xff]
    %v22 = vld [vmem:[%s2 + $0x8] sm:$0xf]
    %v25 = vcombine.high %v16, %v16
    %v26 = vcombine.high %v17, %v17
    %v29 = vpack.c.bf16 %v16, %v16
    %v30 = vpack.c.bf16 %v25, %v25
    %v31 = vpack.c.bf16 %v17, %v17
    %v32 = vpack.c.bf16 %v26, %v26
    %34 = vset.pattern.permute.xlu0 0
    %35 = vperm.xlu0 %34, %v21
    %v36 = vpop.permute.xlu0 %35
    %39 = vset.pattern.permute.xlu0 0
    %40 = vperm.xlu0 %39, %v22
    %v41 = vpop.permute.xlu0 %40
    %vm43 = vcmask 31744
    %v45 = vsel %vm43, %v20, 0
    %vm47 = vcmask 1041408
    %v49 = vsel %vm47, %v29, 0
    %v52 = vsel %vm47, %v30, 0
    %v55 = vsel %vm47, %v31, 0
    %v58 = vsel %vm47, %v32, 0
    %60 = vmatprep.subr.bf16.mxu0 %v52
    %61 = vmatpush1.bf16.msra.mxu0 %v49
    %62 = vmatprep.subr.bf16.mxu0 0
    %63 = vmatpush1.bf16.msra.mxu0 0
    %64 = vmatprep.subr.bf16.mxu0 0
    %65 = vmatpush1.bf16.msra.mxu0 0
    %66 = vmatprep.subr.bf16.mxu0 0
    %67 = vmatpush1.bf16.msra.mxu0 0
    %68 = vmatprep.subr.bf16.mxu0 0
    %69 = vmatpush1.bf16.msra.mxu0 0
    %70 = vmatprep.subr.bf16.mxu0 0
    %71 = vmatpush1.bf16.msra.mxu0 0
    %72 = vmatprep.subr.bf16.mxu0 0
    %73 = vmatpush1.bf16.msra.mxu0 0
    %74 = vmatprep.subr.bf16.mxu0 0
    %75 = vmatpush1.bf16.msra.mxu0 0
    %76 = vmatprep.subr.bf16.mxu0 0
    %77 = vmatpush1.bf16.msra.mxu0 0
    %78 = vmatprep.subr.bf16.mxu0 0
    %79 = vmatpush1.bf16.msra.mxu0 0
    %80 = vmatprep.subr.bf16.mxu0 0
    %81 = vmatpush1.bf16.msra.mxu0 0
    %82 = vmatprep.subr.bf16.mxu0 0
    %83 = vmatpush1.bf16.msra.mxu0 0
    %84 = vmatprep.subr.bf16.mxu0 0
    %85 = vmatpush1.bf16.msra.mxu0 0
    %86 = vmatprep.subr.bf16.mxu0 0
    %87 = vmatpush1.bf16.msra.mxu0 0
    %88 = vmatprep.subr.bf16.mxu0 0
    %89 = vmatpush1.bf16.msra.mxu0 0
    %90 = vmatprep.subr.bf16.mxu0 0
    %91 = vmatpush1.bf16.msra.mxu0 0
    %92 = vmatprep.mubr.bf16.mxu0 0
    %93 = vmatmul.mubr.bf16.gmra.mrb[0].mxu0 %v45
    %v94 = vpop.f32.mrb[0].mxu0
    %v95 = vadd.f32 %v36, %v94
    %v96 = vpop.f32.mrb[0].mxu0
    %v97 = vadd.f32 %v36, %v96
    %v98 = vpop.f32.mrb[0].mxu0
    %v99 = vadd.f32 %v41, %v98
    %v100 = vpop.f32.mrb[0].mxu0
    %v101 = vadd.f32 %v41, %v100
    %102 = vdwg.mxu0
    %103 = vmatprep.subr.bf16.mxu0 %v58
    %104 = vmatpush1.bf16.msra.mxu0 %v55
    %105 = vmatprep.subr.bf16.mxu0 0
    %106 = vmatpush1.bf16.msra.mxu0 0
    %107 = vmatprep.subr.bf16.mxu0 0
    %108 = vmatpush1.bf16.msra.mxu0 0
    %109 = vmatprep.subr.bf16.mxu0 0
    %110 = vmatpush1.bf16.msra.mxu0 0
    %111 = vmatprep.subr.bf16.mxu0 0
    %112 = vmatpush1.bf16.msra.mxu0 0
    %113 = vmatprep.subr.bf16.mxu0 0
    %114 = vmatpush1.bf16.msra.mxu0 0
    %115 = vmatprep.subr.bf16.mxu0 0
    %116 = vmatpush1.bf16.msra.mxu0 0
    %117 = vmatprep.subr.bf16.mxu0 0
    %118 = vmatpush1.bf16.msra.mxu0 0
    %119 = vmatprep.subr.bf16.mxu0 0
    %120 = vmatpush1.bf16.msra.mxu0 0
    %121 = vmatprep.subr.bf16.mxu0 0
    %122 = vmatpush1.bf16.msra.mxu0 0
    %123 = vmatprep.subr.bf16.mxu0 0
    %124 = vmatpush1.bf16.msra.mxu0 0
    %125 = vmatprep.subr.bf16.mxu0 0
    %126 = vmatpush1.bf16.msra.mxu0 0
    %127 = vmatprep.subr.bf16.mxu0 0
    %128 = vmatpush1.bf16.msra.mxu0 0
    %129 = vmatprep.subr.bf16.mxu0 0
    %130 = vmatpush1.bf16.msra.mxu0 0
    %131 = vmatprep.subr.bf16.mxu0 0
    %132 = vmatpush1.bf16.msra.mxu0 0
    %133 = vmatprep.subr.bf16.mxu0 0
    %134 = vmatpush1.bf16.msra.mxu0 0
    %135 = vmatprep.mubr.bf16.mxu0 0
    %136 = vmatmul.mubr.bf16.gmra.mrb[0].mxu0 %v45
    %v137 = vpop.f32.mrb[0].mxu0
    %v138 = vadd.f32 %v36, %v137
    %v139 = vpop.f32.mrb[0].mxu0
    %v140 = vadd.f32 %v36, %v139
    %v141 = vpop.f32.mrb[0].mxu0
    %v142 = vadd.f32 %v41, %v141
    %v143 = vpop.f32.mrb[0].mxu0
    %v144 = vadd.f32 %v41, %v143
    %145 = vdwg.mxu0
    %v146 = vpack.c.bf16 %v95, %v95
    %v147 = vpack.c.bf16 %v97, %v97
    %v148 = vpack.c.bf16 %v99, %v99
    %v149 = vpack.c.bf16 %v101, %v101
    %v152 = vrot.slane %v146, 2
    %v153 = vrot.slane %v147, 2
    %156 = vxpose.xlu0.c.b16.start [1/8] %v152, 128
    %157 = vxpose.xlu0.c.b16.cont [2/8] 0, 128
    %158 = vxpose.xlu0.c.b16.cont [3/8] 0, 128
    %159 = vxpose.xlu0.c.b16.cont [4/8] 0, 128
    %160 = vxpose.xlu0.c.b16.cont [5/8] 0, 128
    %161 = vxpose.xlu0.c.b16.cont [6/8] 0, 128
    %162 = vxpose.xlu0.c.b16.cont [7/8] 0, 128
    %163 = vxpose.xlu0.c.b16.end [8/8] 0, 128
    %v164 = vpop.trf.xlu0
    %v165 = vpop.trf.xlu0
    %v166 = vpop.trf.xlu0
    %v167 = vpop.trf.xlu0
    %v168 = vpop.trf.xlu0
    %v169 = vpop.trf.xlu0
    %v170 = vpop.trf.xlu0
    %v171 = vpop.trf.xlu0
    %172 = vxpose.xlu0.c.b16.start [1/8] %v153, 128
    %173 = vxpose.xlu0.c.b16.cont [2/8] 0, 128
    %174 = vxpose.xlu0.c.b16.cont [3/8] 0, 128
    %175 = vxpose.xlu0.c.b16.cont [4/8] 0, 128
    %176 = vxpose.xlu0.c.b16.cont [5/8] 0, 128
    %177 = vxpose.xlu0.c.b16.cont [6/8] 0, 128
    %178 = vxpose.xlu0.c.b16.cont [7/8] 0, 128
    %179 = vxpose.xlu0.c.b16.end [8/8] 0, 128
    %v180 = vpop.trf.xlu0
    %v181 = vpop.trf.xlu0
    %v182 = vpop.trf.xlu0
    %v183 = vpop.trf.xlu0
    %v184 = vpop.trf.xlu0
    %v185 = vpop.trf.xlu0
    %v186 = vpop.trf.xlu0
    %v187 = vpop.trf.xlu0
    %v189 = vsel %vm43, %v164, 0
    %v192 = vsel %vm43, %v165, 0
    %v195 = vsel %vm43, %v166, 0
    %v198 = vsel %vm43, %v167, 0
    %v201 = vsel %vm43, %v168, 0
    %v204 = vsel %vm43, %v169, 0
    %v207 = vsel %vm43, %v170, 0
    %v210 = vsel %vm43, %v171, 0
    %v213 = vsel %vm43, %v180, 0
    %v216 = vsel %vm43, %v181, 0
    %v219 = vsel %vm43, %v182, 0
    %v222 = vsel %vm43, %v183, 0
    %v225 = vsel %vm43, %v184, 0
    %v228 = vsel %vm43, %v185, 0
    %v231 = vsel %vm43, %v186, 0
    %v234 = vsel %vm43, %v187, 0
    %v237 = vsel %vm47, %v146, 0
    %v240 = vsel %vm47, %v147, 0
    %242 = vmatprep.subr.bf16.mxu0 %v240
    %243 = vmatpush1.bf16.msra.mxu0 %v237
    %244 = vmatprep.subr.bf16.mxu0 0
    %245 = vmatpush1.bf16.msra.mxu0 0
    %246 = vmatprep.subr.bf16.mxu0 0
    %247 = vmatpush1.bf16.msra.mxu0 0
    %248 = vmatprep.subr.bf16.mxu0 0
    %249 = vmatpush1.bf16.msra.mxu0 0
    %250 = vmatprep.subr.bf16.mxu0 0
    %251 = vmatpush1.bf16.msra.mxu0 0
    %252 = vmatprep.subr.bf16.mxu0 0
    %253 = vmatpush1.bf16.msra.mxu0 0
    %254 = vmatprep.subr.bf16.mxu0 0
    %255 = vmatpush1.bf16.msra.mxu0 0
    %256 = vmatprep.subr.bf16.mxu0 0
    %257 = vmatpush1.bf16.msra.mxu0 0
    %258 = vmatprep.subr.bf16.mxu0 0
    %259 = vmatpush1.bf16.msra.mxu0 0
    %260 = vmatprep.subr.bf16.mxu0 0
    %261 = vmatpush1.bf16.msra.mxu0 0
    %262 = vmatprep.subr.bf16.mxu0 0
    %263 = vmatpush1.bf16.msra.mxu0 0
    %264 = vmatprep.subr.bf16.mxu0 0
    %265 = vmatpush1.bf16.msra.mxu0 0
    %266 = vmatprep.subr.bf16.mxu0 0
    %267 = vmatpush1.bf16.msra.mxu0 0
    %268 = vmatprep.subr.bf16.mxu0 0
    %269 = vmatpush1.bf16.msra.mxu0 0
    %270 = vmatprep.subr.bf16.mxu0 0
    %271 = vmatpush1.bf16.msra.mxu0 0
    %272 = vmatprep.subr.bf16.mxu0 0
    %273 = vmatpush1.bf16.msra.mxu0 0
    %274 = vmatprep.mubr.bf16.mxu0 0
    %275 = vmatmul.mubr.bf16.gmra.mrb[0].mxu0 %v189
    %v276 = vpop.f32.mrb[0].mxu0
    %v277 = vadd.f32 0.0, %v276
    %v278 = vpop.f32.mrb[0].mxu0
    %v279 = vadd.f32 0.0, %v278
    %v280 = vpop.f32.mrb[0].mxu0
    %v281 = vadd.f32 0.0, %v280
    %v282 = vpop.f32.mrb[0].mxu0
    %v283 = vadd.f32 0.0, %v282
    %284 = vmatprep.mubr.bf16.mxu0 0
    %285 = vmatmul.mubr.bf16.gmra.mrb[0].mxu0 %v192
    %v286 = vpop.f32.mrb[0].mxu0
    %v287 = vadd.f32 0.0, %v286
    %v288 = vpop.f32.mrb[0].mxu0
    %v289 = vadd.f32 0.0, %v288
    %v290 = vpop.f32.mrb[0].mxu0
    %v291 = vadd.f32 0.0, %v290
    %v292 = vpop.f32.mrb[0].mxu0
    %v293 = vadd.f32 0.0, %v292
    %294 = vmatprep.mubr.bf16.mxu0 0
    %295 = vmatmul.mubr.bf16.gmra.mrb[0].mxu0 %v195
    %v296 = vpop.f32.mrb[0].mxu0
    %v297 = vadd.f32 0.0, %v296
    %v298 = vpop.f32.mrb[0].mxu0
    %v299 = vadd.f32 0.0, %v298
    %v300 = vpop.f32.mrb[0].mxu0
    %v301 = vadd.f32 0.0, %v300
    %v302 = vpop.f32.mrb[0].mxu0
    %v303 = vadd.f32 0.0, %v302
    %304 = vmatprep.mubr.bf16.mxu0 0
    %305 = vmatmul.mubr.bf16.gmra.mrb[0].mxu0 %v198
    %v306 = vpop.f32.mrb[0].mxu0
    %v307 = vadd.f32 0.0, %v306
    %v308 = vpop.f32.mrb[0].mxu0
    %v309 = vadd.f32 0.0, %v308
    %v310 = vpop.f32.mrb[0].mxu0
    %v311 = vadd.f32 0.0, %v310
    %v312 = vpop.f32.mrb[0].mxu0
    %v313 = vadd.f32 0.0, %v312
    %314 = vmatprep.mubr.bf16.mxu0 0
    %315 = vmatmul.mubr.bf16.gmra.mrb[0].mxu0 %v201
    %v316 = vpop.f32.mrb[0].mxu0
    %v317 = vadd.f32 0.0, %v316
    %v318 = vpop.f32.mrb[0].mxu0
    %v319 = vadd.f32 0.0, %v318
    %v320 = vpop.f32.mrb[0].mxu0
    %v321 = vadd.f32 0.0, %v320
    %v322 = vpop.f32.mrb[0].mxu0
    %v323 = vadd.f32 0.0, %v322
    %324 = vmatprep.mubr.bf16.mxu0 0
    %325 = vmatmul.mubr.bf16.gmra.mrb[0].mxu0 %v204
    %v326 = vpop.f32.mrb[0].mxu0
    %v327 = vadd.f32 0.0, %v326
    %v328 = vpop.f32.mrb[0].mxu0
    %v329 = vadd.f32 0.0, %v328
    %v330 = vpop.f32.mrb[0].mxu0
    %v331 = vadd.f32 0.0, %v330
    %v332 = vpop.f32.mrb[0].mxu0
    %v333 = vadd.f32 0.0, %v332
    %334 = vmatprep.mubr.bf16.mxu0 0
    %335 = vmatmul.mubr.bf16.gmra.mrb[0].mxu0 %v207
    %v336 = vpop.f32.mrb[0].mxu0
    %v337 = vadd.f32 0.0, %v336
    %v338 = vpop.f32.mrb[0].mxu0
    %v339 = vadd.f32 0.0, %v338
    %v340 = vpop.f32.mrb[0].mxu0
    %v341 = vadd.f32 0.0, %v340
    %v342 = vpop.f32.mrb[0].mxu0
    %v343 = vadd.f32 0.0, %v342
    %344 = vmatprep.mubr.bf16.mxu0 0
    %345 = vmatmul.mubr.bf16.gmra.mrb[0].mxu0 %v210
    %v346 = vpop.f32.mrb[0].mxu0
    %v347 = vadd.f32 0.0, %v346
    %v348 = vpop.f32.mrb[0].mxu0
    %v349 = vadd.f32 0.0, %v348
    %v350 = vpop.f32.mrb[0].mxu0
    %v351 = vadd.f32 0.0, %v350
    %v352 = vpop.f32.mrb[0].mxu0
    %v353 = vadd.f32 0.0, %v352
    %354 = vmatprep.mubr.bf16.mxu0 0
    %355 = vmatmul.mubr.bf16.gmra.mrb[0].mxu0 %v213
    %v356 = vpop.f32.mrb[0].mxu0
    %v357 = vadd.f32 0.0, %v356
    %v358 = vpop.f32.mrb[0].mxu0
    %v359 = vadd.f32 0.0, %v358
    %v360 = vpop.f32.mrb[0].mxu0
    %v361 = vadd.f32 0.0, %v360
    %v362 = vpop.f32.mrb[0].mxu0
    %v363 = vadd.f32 0.0, %v362
    %364 = vmatprep.mubr.bf16.mxu0 0
    %365 = vmatmul.mubr.bf16.gmra.mrb[0].mxu0 %v216
    %v366 = vpop.f32.mrb[0].mxu0
    %v367 = vadd.f32 0.0, %v366
    %v368 = vpop.f32.mrb[0].mxu0
    %v369 = vadd.f32 0.0, %v368
    %v370 = vpop.f32.mrb[0].mxu0
    %v371 = vadd.f32 0.0, %v370
    %v372 = vpop.f32.mrb[0].mxu0
    %v373 = vadd.f32 0.0, %v372
    %374 = vmatprep.mubr.bf16.mxu0 0
    %375 = vmatmul.mubr.bf16.gmra.mrb[0].mxu0 %v219
    %v376 = vpop.f32.mrb[0].mxu0
    %v377 = vadd.f32 0.0, %v376
    %v378 = vpop.f32.mrb[0].mxu0
    %v379 = vadd.f32 0.0, %v378
    %v380 = vpop.f32.mrb[0].mxu0
    %v381 = vadd.f32 0.0, %v380
    %v382 = vpop.f32.mrb[0].mxu0
    %v383 = vadd.f32 0.0, %v382
    %384 = vmatprep.mubr.bf16.mxu0 0
    %385 = vmatmul.mubr.bf16.gmra.mrb[0].mxu0 %v222
    %v386 = vpop.f32.mrb[0].mxu0
    %v387 = vadd.f32 0.0, %v386
    %v388 = vpop.f32.mrb[0].mxu0
    %v389 = vadd.f32 0.0, %v388
    %v390 = vpop.f32.mrb[0].mxu0
    %v391 = vadd.f32 0.0, %v390
    %v392 = vpop.f32.mrb[0].mxu0
    %v393 = vadd.f32 0.0, %v392
    %394 = vmatprep.mubr.bf16.mxu0 0
    %395 = vmatmul.mubr.bf16.gmra.mrb[0].mxu0 %v225
    %v396 = vpop.f32.mrb[0].mxu0
    %v397 = vadd.f32 0.0, %v396
    %v398 = vpop.f32.mrb[0].mxu0
    %v399 = vadd.f32 0.0, %v398
    %v400 = vpop.f32.mrb[0].mxu0
    %v401 = vadd.f32 0.0, %v400
    %v402 = vpop.f32.mrb[0].mxu0
    %v403 = vadd.f32 0.0, %v402
    %404 = vmatprep.mubr.bf16.mxu0 0
    %405 = vmatmul.mubr.bf16.gmra.mrb[0].mxu0 %v228
    %v406 = vpop.f32.mrb[0].mxu0
    %v407 = vadd.f32 0.0, %v406
    %v408 = vpop.f32.mrb[0].mxu0
    %v409 = vadd.f32 0.0, %v408
    %v410 = vpop.f32.mrb[0].mxu0
    %v411 = vadd.f32 0.0, %v410
    %v412 = vpop.f32.mrb[0].mxu0
    %v413 = vadd.f32 0.0, %v412
    %414 = vmatprep.mubr.bf16.mxu0 0
    %415 = vmatmul.mubr.bf16.gmra.mrb[0].mxu0 %v231
    %v416 = vpop.f32.mrb[0].mxu0
    %v417 = vadd.f32 0.0, %v416
    %v418 = vpop.f32.mrb[0].mxu0
    %v419 = vadd.f32 0.0, %v418
    %v420 = vpop.f32.mrb[0].mxu0
    %v421 = vadd.f32 0.0, %v420
    %v422 = vpop.f32.mrb[0].mxu0
    %v423 = vadd.f32 0.0, %v422
    %424 = vmatprep.mubr.bf16.mxu0 0
    %425 = vmatmul.mubr.bf16.gmra.mrb[0].mxu0 %v234
    %v426 = vpop.f32.mrb[0].mxu0
    %v427 = vadd.f32 0.0, %v426
    %v428 = vpop.f32.mrb[0].mxu0
    %v429 = vadd.f32 0.0, %v428
    %v430 = vpop.f32.mrb[0].mxu0
    %v431 = vadd.f32 0.0, %v430
    %v432 = vpop.f32.mrb[0].mxu0
    %v433 = vadd.f32 0.0, %v432
    %434 = vdwg.mxu0
    %v435 = vmax.f32 %v277, %v279
    %436 = vmax.xlane.f32.xlu0 %v435
    %v437 = vpop.xlane.xlu0 %436
    %v438 = vmax.f32 %v281, %v283
    %439 = vmax.xlane.f32.xlu0 %v438
    %v440 = vpop.xlane.xlu0 %439
    %v441 = vmax.f32 %v287, %v289
    %442 = vmax.xlane.f32.xlu0 %v441
    %v443 = vpop.xlane.xlu0 %442
    %v444 = vmax.f32 %v291, %v293
    %445 = vmax.xlane.f32.xlu0 %v444
    %v446 = vpop.xlane.xlu0 %445
    %v447 = vmax.f32 %v297, %v299
    %448 = vmax.xlane.f32.xlu0 %v447
    %v449 = vpop.xlane.xlu0 %448
    %v450 = vmax.f32 %v301, %v303
    %451 = vmax.xlane.f32.xlu0 %v450
    %v452 = vpop.xlane.xlu0 %451
    %v453 = vmax.f32 %v307, %v309
    %454 = vmax.xlane.f32.xlu0 %v453
    %v455 = vpop.xlane.xlu0 %454
    %v456 = vmax.f32 %v311, %v313
    %457 = vmax.xlane.f32.xlu0 %v456
    %v458 = vpop.xlane.xlu0 %457
    %v459 = vmax.f32 %v317, %v319
    %460 = vmax.xlane.f32.xlu0 %v459
    %v461 = vpop.xlane.xlu0 %460
    %v462 = vmax.f32 %v321, %v323
    %463 = vmax.xlane.f32.xlu0 %v462
    %v464 = vpop.xlane.xlu0 %463
    %v465 = vmax.f32 %v327, %v329
    %466 = vmax.xlane.f32.xlu0 %v465
    %v467 = vpop.xlane.xlu0 %466
    %v468 = vmax.f32 %v331, %v333
    %469 = vmax.xlane.f32.xlu0 %v468
    %v470 = vpop.xlane.xlu0 %469
    %v471 = vmax.f32 %v337, %v339
    %472 = vmax.xlane.f32.xlu0 %v471
    %v473 = vpop.xlane.xlu0 %472
    %v474 = vmax.f32 %v341, %v343
    %475 = vmax.xlane.f32.xlu0 %v474
    %v476 = vpop.xlane.xlu0 %475
    %v477 = vmax.f32 %v347, %v349
    %478 = vmax.xlane.f32.xlu0 %v477
    %v479 = vpop.xlane.xlu0 %478
    %v480 = vmax.f32 %v351, %v353
    %481 = vmax.xlane.f32.xlu0 %v480
    %v482 = vpop.xlane.xlu0 %481
    %v483 = vmax.f32 %v357, %v359
    %484 = vmax.xlane.f32.xlu0 %v483
    %v485 = vpop.xlane.xlu0 %484
    %v486 = vmax.f32 %v361, %v363
    %487 = vmax.xlane.f32.xlu0 %v486
    %v488 = vpop.xlane.xlu0 %487
    %v489 = vmax.f32 %v367, %v369
    %490 = vmax.xlane.f32.xlu0 %v489
    %v491 = vpop.xlane.xlu0 %490
    %v492 = vmax.f32 %v371, %v373
    %493 = vmax.xlane.f32.xlu0 %v492
    %v494 = vpop.xlane.xlu0 %493
    %v495 = vmax.f32 %v377, %v379
    %496 = vmax.xlane.f32.xlu0 %v495
    %v497 = vpop.xlane.xlu0 %496
    %v498 = vmax.f32 %v381, %v383
    %499 = vmax.xlane.f32.xlu0 %v498
    %v500 = vpop.xlane.xlu0 %499
    %v501 = vmax.f32 %v387, %v389
    %502 = vmax.xlane.f32.xlu0 %v501
    %v503 = vpop.xlane.xlu0 %502
    %v504 = vmax.f32 %v391, %v393
    %505 = vmax.xlane.f32.xlu0 %v504
    %v506 = vpop.xlane.xlu0 %505
    %v507 = vmax.f32 %v397, %v399
    %508 = vmax.xlane.f32.xlu0 %v507
    %v509 = vpop.xlane.xlu0 %508
    %v510 = vmax.f32 %v401, %v403
    %511 = vmax.xlane.f32.xlu0 %v510
    %v512 = vpop.xlane.xlu0 %511
    %v513 = vmax.f32 %v407, %v409
    %514 = vmax.xlane.f32.xlu0 %v513
    %v515 = vpop.xlane.xlu0 %514
    %v516 = vmax.f32 %v411, %v413
    %517 = vmax.xlane.f32.xlu0 %v516
    %v518 = vpop.xlane.xlu0 %517
    %v519 = vmax.f32 %v417, %v419
    %520 = vmax.xlane.f32.xlu0 %v519
    %v521 = vpop.xlane.xlu0 %520
    %v522 = vmax.f32 %v421, %v423
    %523 = vmax.xlane.f32.xlu0 %v522
    %v524 = vpop.xlane.xlu0 %523
    %v525 = vmax.f32 %v427, %v429
    %526 = vmax.xlane.f32.xlu0 %v525
    %v527 = vpop.xlane.xlu0 %526
    %v528 = vmax.f32 %v431, %v433
    %529 = vmax.xlane.f32.xlu0 %v528
    %v530 = vpop.xlane.xlu0 %529
    %v531 = vsub.f32 %v277, %v437
    %v532 = vsub.f32 %v279, %v437
    %v533 = vsub.f32 %v281, %v440
    %v534 = vsub.f32 %v283, %v440
    %v535 = vsub.f32 %v287, %v443
    %v536 = vsub.f32 %v289, %v443
    %v537 = vsub.f32 %v291, %v446
    %v538 = vsub.f32 %v293, %v446
    %v539 = vsub.f32 %v297, %v449
    %v540 = vsub.f32 %v299, %v449
    %v541 = vsub.f32 %v301, %v452
    %v542 = vsub.f32 %v303, %v452
    %v543 = vsub.f32 %v307, %v455
    %v544 = vsub.f32 %v309, %v455
    %v545 = vsub.f32 %v311, %v458
    %v546 = vsub.f32 %v313, %v458
    %v547 = vsub.f32 %v317, %v461
    %v548 = vsub.f32 %v319, %v461
    %v549 = vsub.f32 %v321, %v464
    %v550 = vsub.f32 %v323, %v464
    %v551 = vsub.f32 %v327, %v467
    %v552 = vsub.f32 %v329, %v467
    %v553 = vsub.f32 %v331, %v470
    %v554 = vsub.f32 %v333, %v470
    %v555 = vsub.f32 %v337, %v473
    %v556 = vsub.f32 %v339, %v473
    %v557 = vsub.f32 %v341, %v476
    %v558 = vsub.f32 %v343, %v476
    %v559 = vsub.f32 %v347, %v479
    %v560 = vsub.f32 %v349, %v479
    %v561 = vsub.f32 %v351, %v482
    %v562 = vsub.f32 %v353, %v482
    %v563 = vsub.f32 %v357, %v485
    %v564 = vsub.f32 %v359, %v485
    %v565 = vsub.f32 %v361, %v488
    %v566 = vsub.f32 %v363, %v488
    %v567 = vsub.f32 %v367, %v491
    %v568 = vsub.f32 %v369, %v491
    %v569 = vsub.f32 %v371, %v494
    %v570 = vsub.f32 %v373, %v494
    %v571 = vsub.f32 %v377, %v497
    %v572 = vsub.f32 %v379, %v497
    %v573 = vsub.f32 %v381, %v500
    %v574 = vsub.f32 %v383, %v500
    %v575 = vsub.f32 %v387, %v503
    %v576 = vsub.f32 %v389, %v503
    %v577 = vsub.f32 %v391, %v506
    %v578 = vsub.f32 %v393, %v506
    %v579 = vsub.f32 %v397, %v509
    %v580 = vsub.f32 %v399, %v509
    %v581 = vsub.f32 %v401, %v512
    %v582 = vsub.f32 %v403, %v512
    %v583 = vsub.f32 %v407, %v515
    %v584 = vsub.f32 %v409, %v515
    %v585 = vsub.f32 %v411, %v518
    %v586 = vsub.f32 %v413, %v518
    %v587 = vsub.f32 %v417, %v521
    %v588 = vsub.f32 %v419, %v521
    %v589 = vsub.f32 %v421, %v524
    %v590 = vsub.f32 %v423, %v524
    %v591 = vsub.f32 %v427, %v527
    %v592 = vsub.f32 %v429, %v527
    %v593 = vsub.f32 %v431, %v530
    %v594 = vsub.f32 %v433, %v530
    %v595 = vmul.f32 %v531, 1.442695
    %v596 = vpow.pop %v595
    %v597 = vmul.f32 %v532, 1.442695
    %v598 = vpow.pop %v597
    %v599 = vmul.f32 %v533, 1.442695
    %v600 = vpow.pop %v599
    %v601 = vmul.f32 %v534, 1.442695
    %v602 = vpow.pop %v601
    %v603 = vmul.f32 %v535, 1.442695
    %v604 = vpow.pop %v603
    %v605 = vmul.f32 %v536, 1.442695
    %v606 = vpow.pop %v605
    %v607 = vmul.f32 %v537, 1.442695
    %v608 = vpow.pop %v607
    %v609 = vmul.f32 %v538, 1.442695
    %v610 = vpow.pop %v609
    %v611 = vmul.f32 %v539, 1.442695
    %v612 = vpow.pop %v611
    %v613 = vmul.f32 %v540, 1.442695
    %v614 = vpow.pop %v613
    %v615 = vmul.f32 %v541, 1.442695
    %v616 = vpow.pop %v615
    %v617 = vmul.f32 %v542, 1.442695
    %v618 = vpow.pop %v617
    %v619 = vmul.f32 %v543, 1.442695
    %v620 = vpow.pop %v619
    %v621 = vmul.f32 %v544, 1.442695
    %v622 = vpow.pop %v621
    %v623 = vmul.f32 %v545, 1.442695
    %v624 = vpow.pop %v623
    %v625 = vmul.f32 %v546, 1.442695
    %v626 = vpow.pop %v625
    %v627 = vmul.f32 %v547, 1.442695
    %v628 = vpow.pop %v627
    %v629 = vmul.f32 %v548, 1.442695
    %v630 = vpow.pop %v629
    %v631 = vmul.f32 %v549, 1.442695
    %v632 = vpow.pop %v631
    %v633 = vmul.f32 %v550, 1.442695
    %v634 = vpow.pop %v633
    %v635 = vmul.f32 %v551, 1.442695
    %v636 = vpow.pop %v635
    %v637 = vmul.f32 %v552, 1.442695
    %v638 = vpow.pop %v637
    %v639 = vmul.f32 %v553, 1.442695
    %v640 = vpow.pop %v639
    %v641 = vmul.f32 %v554, 1.442695
    %v642 = vpow.pop %v641
    %v643 = vmul.f32 %v555, 1.442695
    %v644 = vpow.pop %v643
    %v645 = vmul.f32 %v556, 1.442695
    %v646 = vpow.pop %v645
    %v647 = vmul.f32 %v557, 1.442695
    %v648 = vpow.pop %v647
    %v649 = vmul.f32 %v558, 1.442695
    %v650 = vpow.pop %v649
    %v651 = vmul.f32 %v559, 1.442695
    %v652 = vpow.pop %v651
    %v653 = vmul.f32 %v560, 1.442695
    %v654 = vpow.pop %v653
    %v655 = vmul.f32 %v561, 1.442695
    %v656 = vpow.pop %v655
    %v657 = vmul.f32 %v562, 1.442695
    %v658 = vpow.pop %v657
    %v659 = vmul.f32 %v563, 1.442695
    %v660 = vpow.pop %v659
    %v661 = vmul.f32 %v564, 1.442695
    %v662 = vpow.pop %v661
    %v663 = vmul.f32 %v565, 1.442695
    %v664 = vpow.pop %v663
    %v665 = vmul.f32 %v566, 1.442695
    %v666 = vpow.pop %v665
    %v667 = vmul.f32 %v567, 1.442695
    %v668 = vpow.pop %v667
    %v669 = vmul.f32 %v568, 1.442695
    %v670 = vpow.pop %v669
    %v671 = vmul.f32 %v569, 1.442695
    %v672 = vpow.pop %v671
    %v673 = vmul.f32 %v570, 1.442695
    %v674 = vpow.pop %v673
    %v675 = vmul.f32 %v571, 1.442695
    %v676 = vpow.pop %v675
    %v677 = vmul.f32 %v572, 1.442695
    %v678 = vpow.pop %v677
    %v679 = vmul.f32 %v573, 1.442695
    %v680 = vpow.pop %v679
    %v681 = vmul.f32 %v574, 1.442695
    %v682 = vpow.pop %v681
    %v683 = vmul.f32 %v575, 1.442695
    %v684 = vpow.pop %v683
    %v685 = vmul.f32 %v576, 1.442695
    %v686 = vpow.pop %v685
    %v687 = vmul.f32 %v577, 1.442695
    %v688 = vpow.pop %v687
    %v689 = vmul.f32 %v578, 1.442695
    %v690 = vpow.pop %v689
    %v691 = vmul.f32 %v579, 1.442695
    %v692 = vpow.pop %v691
    %v693 = vmul.f32 %v580, 1.442695
    %v694 = vpow.pop %v693
    %v695 = vmul.f32 %v581, 1.442695
    %v696 = vpow.pop %v695
    %v697 = vmul.f32 %v582, 1.442695
    %v698 = vpow.pop %v697
    %v699 = vmul.f32 %v583, 1.442695
    %v700 = vpow.pop %v699
    %v701 = vmul.f32 %v584, 1.442695
    %v702 = vpow.pop %v701
    %v703 = vmul.f32 %v585, 1.442695
    %v704 = vpow.pop %v703
    %v705 = vmul.f32 %v586, 1.442695
    %v706 = vpow.pop %v705
    %v707 = vmul.f32 %v587, 1.442695
    %v708 = vpow.pop %v707
    %v709 = vmul.f32 %v588, 1.442695
    %v710 = vpow.pop %v709
    %v711 = vmul.f32 %v589, 1.442695
    %v712 = vpow.pop %v711
    %v713 = vmul.f32 %v590, 1.442695
    %v714 = vpow.pop %v713
    %v715 = vmul.f32 %v591, 1.442695
    %v716 = vpow.pop %v715
    %v717 = vmul.f32 %v592, 1.442695
    %v718 = vpow.pop %v717
    %v719 = vmul.f32 %v593, 1.442695
    %v720 = vpow.pop %v719
    %v721 = vmul.f32 %v594, 1.442695
    %v722 = vpow.pop %v721
    %v723 = vadd.f32 %v596, %v598
    %724 = vadd.xlane.f32.xlu0 %v723
    %v725 = vpop.xlane.xlu0 %724
    %v726 = vadd.f32 %v600, %v602
    %727 = vadd.xlane.f32.xlu0 %v726
    %v728 = vpop.xlane.xlu0 %727
    %v729 = vadd.f32 %v604, %v606
    %730 = vadd.xlane.f32.xlu0 %v729
    %v731 = vpop.xlane.xlu0 %730
    %v732 = vadd.f32 %v608, %v610
    %733 = vadd.xlane.f32.xlu0 %v732
    %v734 = vpop.xlane.xlu0 %733
    %v735 = vadd.f32 %v612, %v614
    %736 = vadd.xlane.f32.xlu0 %v735
    %v737 = vpop.xlane.xlu0 %736
    %v738 = vadd.f32 %v616, %v618
    %739 = vadd.xlane.f32.xlu0 %v738
    %v740 = vpop.xlane.xlu0 %739
    %v741 = vadd.f32 %v620, %v622
    %742 = vadd.xlane.f32.xlu0 %v741
    %v743 = vpop.xlane.xlu0 %742
    %v744 = vadd.f32 %v624, %v626
    %745 = vadd.xlane.f32.xlu0 %v744
    %v746 = vpop.xlane.xlu0 %745
    %v747 = vadd.f32 %v628, %v630
    %748 = vadd.xlane.f32.xlu0 %v747
    %v749 = vpop.xlane.xlu0 %748
    %v750 = vadd.f32 %v632, %v634
    %751 = vadd.xlane.f32.xlu0 %v750
    %v752 = vpop.xlane.xlu0 %751
    %v753 = vadd.f32 %v636, %v638
    %754 = vadd.xlane.f32.xlu0 %v753
    %v755 = vpop.xlane.xlu0 %754
    %v756 = vadd.f32 %v640, %v642
    %757 = vadd.xlane.f32.xlu0 %v756
    %v758 = vpop.xlane.xlu0 %757
    %v759 = vadd.f32 %v644, %v646
    %760 = vadd.xlane.f32.xlu0 %v759
    %v761 = vpop.xlane.xlu0 %760
    %v762 = vadd.f32 %v648, %v650
    %763 = vadd.xlane.f32.xlu0 %v762
    %v764 = vpop.xlane.xlu0 %763
    %v765 = vadd.f32 %v652, %v654
    %766 = vadd.xlane.f32.xlu0 %v765
    %v767 = vpop.xlane.xlu0 %766
    %v768 = vadd.f32 %v656, %v658
    %769 = vadd.xlane.f32.xlu0 %v768
    %v770 = vpop.xlane.xlu0 %769
    %v771 = vadd.f32 %v660, %v662
    %772 = vadd.xlane.f32.xlu0 %v771
    %v773 = vpop.xlane.xlu0 %772
    %v774 = vadd.f32 %v664, %v666
    %775 = vadd.xlane.f32.xlu0 %v774
    %v776 = vpop.xlane.xlu0 %775
    %v777 = vadd.f32 %v668, %v670
    %778 = vadd.xlane.f32.xlu0 %v777
    %v779 = vpop.xlane.xlu0 %778
    %v780 = vadd.f32 %v672, %v674
    %781 = vadd.xlane.f32.xlu0 %v780
    %v782 = vpop.xlane.xlu0 %781
    %v783 = vadd.f32 %v676, %v678
    %784 = vadd.xlane.f32.xlu0 %v783
    %v785 = vpop.xlane.xlu0 %784
    %v786 = vadd.f32 %v680, %v682
    %787 = vadd.xlane.f32.xlu0 %v786
    %v788 = vpop.xlane.xlu0 %787
    %v789 = vadd.f32 %v684, %v686
    %790 = vadd.xlane.f32.xlu0 %v789
    %v791 = vpop.xlane.xlu0 %790
    %v792 = vadd.f32 %v688, %v690
    %793 = vadd.xlane.f32.xlu0 %v792
    %v794 = vpop.xlane.xlu0 %793
    %v795 = vadd.f32 %v692, %v694
    %796 = vadd.xlane.f32.xlu0 %v795
    %v797 = vpop.xlane.xlu0 %796
    %v798 = vadd.f32 %v696, %v698
    %799 = vadd.xlane.f32.xlu0 %v798
    %v800 = vpop.xlane.xlu0 %799
    %v801 = vadd.f32 %v700, %v702
    %802 = vadd.xlane.f32.xlu0 %v801
    %v803 = vpop.xlane.xlu0 %802
    %v804 = vadd.f32 %v704, %v706
    %805 = vadd.xlane.f32.xlu0 %v804
    %v806 = vpop.xlane.xlu0 %805
    %v807 = vadd.f32 %v708, %v710
    %808 = vadd.xlane.f32.xlu0 %v807
    %v809 = vpop.xlane.xlu0 %808
    %v810 = vadd.f32 %v712, %v714
    %811 = vadd.xlane.f32.xlu0 %v810
    %v812 = vpop.xlane.xlu0 %811
    %v813 = vadd.f32 %v716, %v718
    %814 = vadd.xlane.f32.xlu0 %v813
    %v815 = vpop.xlane.xlu0 %814
    %v816 = vadd.f32 %v720, %v722
    %817 = vadd.xlane.f32.xlu0 %v816
    %v818 = vpop.xlane.xlu0 %817
    %v819 = vrcp.pop %v725
    %v820 = vrcp.pop %v728
    %v821 = vrcp.pop %v731
    %v822 = vrcp.pop %v734
    %v823 = vrcp.pop %v737
    %v824 = vrcp.pop %v740
    %v825 = vrcp.pop %v743
    %v826 = vrcp.pop %v746
    %v827 = vrcp.pop %v749
    %v828 = vrcp.pop %v752
    %v829 = vrcp.pop %v755
    %v830 = vrcp.pop %v758
    %v831 = vrcp.pop %v761
    %v832 = vrcp.pop %v764
    %v833 = vrcp.pop %v767
    %v834 = vrcp.pop %v770
    %v835 = vrcp.pop %v773
    %v836 = vrcp.pop %v776
    %v837 = vrcp.pop %v779
    %v838 = vrcp.pop %v782
    %v839 = vrcp.pop %v785
    %v840 = vrcp.pop %v788
    %v841 = vrcp.pop %v791
    %v842 = vrcp.pop %v794
    %v843 = vrcp.pop %v797
    %v844 = vrcp.pop %v800
    %v845 = vrcp.pop %v803
    %v846 = vrcp.pop %v806
    %v847 = vrcp.pop %v809
    %v848 = vrcp.pop %v812
    %v849 = vrcp.pop %v815
    %v850 = vrcp.pop %v818
    %v851 = vmul.f32 %v596, %v819
    %v852 = vmul.f32 %v598, %v819
    %v853 = vmul.f32 %v600, %v820
    %v854 = vmul.f32 %v602, %v820
    %v855 = vmul.f32 %v604, %v821
    %v856 = vmul.f32 %v606, %v821
    %v857 = vmul.f32 %v608, %v822
    %v858 = vmul.f32 %v610, %v822
    %v859 = vmul.f32 %v612, %v823
    %v860 = vmul.f32 %v614, %v823
    %v861 = vmul.f32 %v616, %v824
    %v862 = vmul.f32 %v618, %v824
    %v863 = vmul.f32 %v620, %v825
    %v864 = vmul.f32 %v622, %v825
    %v865 = vmul.f32 %v624, %v826
    %v866 = vmul.f32 %v626, %v826
    %v867 = vmul.f32 %v628, %v827
    %v868 = vmul.f32 %v630, %v827
    %v869 = vmul.f32 %v632, %v828
    %v870 = vmul.f32 %v634, %v828
    %v871 = vmul.f32 %v636, %v829
    %v872 = vmul.f32 %v638, %v829
    %v873 = vmul.f32 %v640, %v830
    %v874 = vmul.f32 %v642, %v830
    %v875 = vmul.f32 %v644, %v831
    %v876 = vmul.f32 %v646, %v831
    %v877 = vmul.f32 %v648, %v832
    %v878 = vmul.f32 %v650, %v832
    %v879 = vmul.f32 %v652, %v833
    %v880 = vmul.f32 %v654, %v833
    %v881 = vmul.f32 %v656, %v834
    %v882 = vmul.f32 %v658, %v834
    %v883 = vmul.f32 %v660, %v835
    %v884 = vmul.f32 %v662, %v835
    %v885 = vmul.f32 %v664, %v836
    %v886 = vmul.f32 %v666, %v836
    %v887 = vmul.f32 %v668, %v837
    %v888 = vmul.f32 %v670, %v837
    %v889 = vmul.f32 %v672, %v838
    %v890 = vmul.f32 %v674, %v838
    %v891 = vmul.f32 %v676, %v839
    %v892 = vmul.f32 %v678, %v839
    %v893 = vmul.f32 %v680, %v840
    %v894 = vmul.f32 %v682, %v840
    %v895 = vmul.f32 %v684, %v841
    %v896 = vmul.f32 %v686, %v841
    %v897 = vmul.f32 %v688, %v842
    %v898 = vmul.f32 %v690, %v842
    %v899 = vmul.f32 %v692, %v843
    %v900 = vmul.f32 %v694, %v843
    %v901 = vmul.f32 %v696, %v844
    %v902 = vmul.f32 %v698, %v844
    %v903 = vmul.f32 %v700, %v845
    %v904 = vmul.f32 %v702, %v845
    %v905 = vmul.f32 %v704, %v846
    %v906 = vmul.f32 %v706, %v846
    %v907 = vmul.f32 %v708, %v847
    %v908 = vmul.f32 %v710, %v847
    %v909 = vmul.f32 %v712, %v848
    %v910 = vmul.f32 %v714, %v848
    %v911 = vmul.f32 %v716, %v849
    %v912 = vmul.f32 %v718, %v849
    %v913 = vmul.f32 %v720, %v850
    %v914 = vmul.f32 %v722, %v850
    %v915 = vpack.c.bf16 %v853, %v851
    %v916 = vpack.c.bf16 %v854, %v852
    %v917 = vpack.c.bf16 %v857, %v855
    %v918 = vpack.c.bf16 %v858, %v856
    %v919 = vpack.c.bf16 %v861, %v859
    %v920 = vpack.c.bf16 %v862, %v860
    %v921 = vpack.c.bf16 %v865, %v863
    %v922 = vpack.c.bf16 %v866, %v864
    %v923 = vpack.c.bf16 %v869, %v867
    %v924 = vpack.c.bf16 %v870, %v868
    %v925 = vpack.c.bf16 %v873, %v871
    %v926 = vpack.c.bf16 %v874, %v872
    %v927 = vpack.c.bf16 %v877, %v875
    %v928 = vpack.c.bf16 %v878, %v876
    %v929 = vpack.c.bf16 %v881, %v879
    %v930 = vpack.c.bf16 %v882, %v880
    %v931 = vpack.c.bf16 %v885, %v883
    %v932 = vpack.c.bf16 %v886, %v884
    %v933 = vpack.c.bf16 %v889, %v887
    %v934 = vpack.c.bf16 %v890, %v888
    %v935 = vpack.c.bf16 %v893, %v891
    %v936 = vpack.c.bf16 %v894, %v892
    %v937 = vpack.c.bf16 %v897, %v895
    %v938 = vpack.c.bf16 %v898, %v896
    %v939 = vpack.c.bf16 %v901, %v899
    %v940 = vpack.c.bf16 %v902, %v900
    %v941 = vpack.c.bf16 %v905, %v903
    %v942 = vpack.c.bf16 %v906, %v904
    %v943 = vpack.c.bf16 %v909, %v907
    %v944 = vpack.c.bf16 %v910, %v908
    %v945 = vpack.c.bf16 %v913, %v911
    %v946 = vpack.c.bf16 %v914, %v912
    %947 = vmatprep.subr.bf16.mxu0 %v916
    %948 = vmatpush1.bf16.msra.mxu0 %v915
    %949 = vmatprep.subr.bf16.mxu0 %v918
    %950 = vmatpush1.bf16.msra.mxu0 %v917
    %951 = vmatprep.subr.bf16.mxu0 %v920
    %952 = vmatpush1.bf16.msra.mxu0 %v919
    %953 = vmatprep.subr.bf16.mxu0 %v922
    %954 = vmatpush1.bf16.msra.mxu0 %v921
    %955 = vmatprep.subr.bf16.mxu0 %v924
    %956 = vmatpush1.bf16.msra.mxu0 %v923
    %957 = vmatprep.subr.bf16.mxu0 %v926
    %958 = vmatpush1.bf16.msra.mxu0 %v925
    %959 = vmatprep.subr.bf16.mxu0 %v928
    %960 = vmatpush1.bf16.msra.mxu0 %v927
    %961 = vmatprep.subr.bf16.mxu0 %v930
    %962 = vmatpush1.bf16.msra.mxu0 %v929
    %963 = vmatprep.subr.bf16.mxu0 %v932
    %964 = vmatpush1.bf16.msra.mxu0 %v931
    %965 = vmatprep.subr.bf16.mxu0 %v934
    %966 = vmatpush1.bf16.msra.mxu0 %v933
    %967 = vmatprep.subr.bf16.mxu0 %v936
    %968 = vmatpush1.bf16.msra.mxu0 %v935
    %969 = vmatprep.subr.bf16.mxu0 %v938
    %970 = vmatpush1.bf16.msra.mxu0 %v937
    %971 = vmatprep.subr.bf16.mxu0 %v940
    %972 = vmatpush1.bf16.msra.mxu0 %v939
    %973 = vmatprep.subr.bf16.mxu0 %v942
    %974 = vmatpush1.bf16.msra.mxu0 %v941
    %975 = vmatprep.subr.bf16.mxu0 %v944
    %976 = vmatpush1.bf16.msra.mxu0 %v943
    %977 = vmatprep.subr.bf16.mxu0 %v946
    %978 = vmatpush1.bf16.msra.mxu0 %v945
    %979 = vmatprep.mubr.bf16.mxu0 %v149
    %980 = vmatmul.mubr.bf16.gmra.mrb[0].mxu0 %v148
    %v981 = vpop.f32.mrb[0].mxu0
    %v982 = vadd.f32 %v16, %v981
    %v983 = vpop.f32.mrb[0].mxu0
    %v984 = vadd.f32 %v25, %v983
    %v985 = vpop.f32.mrb[0].mxu0
    %v986 = vpop.f32.mrb[0].mxu0
    %987 = vdwg.mxu0
    %v990 = vcombine.low %v982, %v984
    %992 = vst [vmem:[#allocation2] sm:$0xff] %v990
    %v993 = vpack.c.bf16 %v138, %v138
    %v994 = vpack.c.bf16 %v140, %v140
    %v995 = vpack.c.bf16 %v142, %v142
    %v996 = vpack.c.bf16 %v144, %v144
    %v999 = vrot.slane %v993, 2
    %v1000 = vrot.slane %v994, 2
    %1003 = vxpose.xlu0.c.b16.start [1/8] %v999, 128
    %1004 = vxpose.xlu0.c.b16.cont [2/8] 0, 128
    %1005 = vxpose.xlu0.c.b16.cont [3/8] 0, 128
    %1006 = vxpose.xlu0.c.b16.cont [4/8] 0, 128
    %1007 = vxpose.xlu0.c.b16.cont [5/8] 0, 128
    %1008 = vxpose.xlu0.c.b16.cont [6/8] 0, 128
    %1009 = vxpose.xlu0.c.b16.cont [7/8] 0, 128
    %1010 = vxpose.xlu0.c.b16.end [8/8] 0, 128
    %v1011 = vpop.trf.xlu0
    %v1012 = vpop.trf.xlu0
    %v1013 = vpop.trf.xlu0
    %v1014 = vpop.trf.xlu0
    %v1015 = vpop.trf.xlu0
    %v1016 = vpop.trf.xlu0
    %v1017 = vpop.trf.xlu0
    %v1018 = vpop.trf.xlu0
    %1019 = vxpose.xlu0.c.b16.start [1/8] %v1000, 128
    %1020 = vxpose.xlu0.c.b16.cont [2/8] 0, 128
    %1021 = vxpose.xlu0.c.b16.cont [3/8] 0, 128
    %1022 = vxpose.xlu0.c.b16.cont [4/8] 0, 128
    %1023 = vxpose.xlu0.c.b16.cont [5/8] 0, 128
    %1024 = vxpose.xlu0.c.b16.cont [6/8] 0, 128
    %1025 = vxpose.xlu0.c.b16.cont [7/8] 0, 128
    %1026 = vxpose.xlu0.c.b16.end [8/8] 0, 128
    %v1027 = vpop.trf.xlu0
    %v1028 = vpop.trf.xlu0
    %v1029 = vpop.trf.xlu0
    %v1030 = vpop.trf.xlu0
    %v1031 = vpop.trf.xlu0
    %v1032 = vpop.trf.xlu0
    %v1033 = vpop.trf.xlu0
    %v1034 = vpop.trf.xlu0
    %v1036 = vsel %vm43, %v1011, 0
    %v1039 = vsel %vm43, %v1012, 0
    %v1042 = vsel %vm43, %v1013, 0
    %v1045 = vsel %vm43, %v1014, 0
    %v1048 = vsel %vm43, %v1015, 0
    %v1051 = vsel %vm43, %v1016, 0
    %v1054 = vsel %vm43, %v1017, 0
    %v1057 = vsel %vm43, %v1018, 0
    %v1060 = vsel %vm43, %v1027, 0
    %v1063 = vsel %vm43, %v1028, 0
    %v1066 = vsel %vm43, %v1029, 0
    %v1069 = vsel %vm43, %v1030, 0
    %v1072 = vsel %vm43, %v1031, 0
    %v1075 = vsel %vm43, %v1032, 0
    %v1078 = vsel %vm43, %v1033, 0
    %v1081 = vsel %vm43, %v1034, 0
    %v1084 = vsel %vm47, %v993, 0
    %v1087 = vsel %vm47, %v994, 0
    %1089 = vmatprep.subr.bf16.mxu0 %v1087
    %1090 = vmatpush1.bf16.msra.mxu0 %v1084
    %1091 = vmatprep.subr.bf16.mxu0 0
    %1092 = vmatpush1.bf16.msra.mxu0 0
    %1093 = vmatprep.subr.bf16.mxu0 0
    %1094 = vmatpush1.bf16.msra.mxu0 0
    %1095 = vmatprep.subr.bf16.mxu0 0
    %1096 = vmatpush1.bf16.msra.mxu0 0
    %1097 = vmatprep.subr.bf16.mxu0 0
    %1098 = vmatpush1.bf16.msra.mxu0 0
    %1099 = vmatprep.subr.bf16.mxu0 0
    %1100 = vmatpush1.bf16.msra.mxu0 0
    %1101 = vmatprep.subr.bf16.mxu0 0
    %1102 = vmatpush1.bf16.msra.mxu0 0
    %1103 = vmatprep.subr.bf16.mxu0 0
    %1104 = vmatpush1.bf16.msra.mxu0 0
    %1105 = vmatprep.subr.bf16.mxu0 0
    %1106 = vmatpush1.bf16.msra.mxu0 0
    %1107 = vmatprep.subr.bf16.mxu0 0
    %1108 = vmatpush1.bf16.msra.mxu0 0
    %1109 = vmatprep.subr.bf16.mxu0 0
    %1110 = vmatpush1.bf16.msra.mxu0 0
    %1111 = vmatprep.subr.bf16.mxu0 0
    %1112 = vmatpush1.bf16.msra.mxu0 0
    %1113 = vmatprep.subr.bf16.mxu0 0
    %1114 = vmatpush1.bf16.msra.mxu0 0
    %1115 = vmatprep.subr.bf16.mxu0 0
    %1116 = vmatpush1.bf16.msra.mxu0 0
    %1117 = vmatprep.subr.bf16.mxu0 0
    %1118 = vmatpush1.bf16.msra.mxu0 0
    %1119 = vmatprep.subr.bf16.mxu0 0
    %1120 = vmatpush1.bf16.msra.mxu0 0
    %1121 = vmatprep.mubr.bf16.mxu0 0
    %1122 = vmatmul.mubr.bf16.gmra.mrb[0].mxu0 %v1036
    %v1123 = vpop.f32.mrb[0].mxu0
    %v1124 = vadd.f32 0.0, %v1123
    %v1125 = vpop.f32.mrb[0].mxu0
    %v1126 = vadd.f32 0.0, %v1125
    %v1127 = vpop.f32.mrb[0].mxu0
    %v1128 = vadd.f32 0.0, %v1127
    %v1129 = vpop.f32.mrb[0].mxu0
    %v1130 = vadd.f32 0.0, %v1129
    %1131 = vmatprep.mubr.bf16.mxu0 0
    %1132 = vmatmul.mubr.bf16.gmra.mrb[0].mxu0 %v1039
    %v1133 = vpop.f32.mrb[0].mxu0
    %v1134 = vadd.f32 0.0, %v1133
    %v1135 = vpop.f32.mrb[0].mxu0
    %v1136 = vadd.f32 0.0, %v1135
    %v1137 = vpop.f32.mrb[0].mxu0
    %v1138 = vadd.f32 0.0, %v1137
    %v1139 = vpop.f32.mrb[0].mxu0
    %v1140 = vadd.f32 0.0, %v1139
    %1141 = vmatprep.mubr.bf16.mxu0 0
    %1142 = vmatmul.mubr.bf16.gmra.mrb[0].mxu0 %v1042
    %v1143 = vpop.f32.mrb[0].mxu0
    %v1144 = vadd.f32 0.0, %v1143
    %v1145 = vpop.f32.mrb[0].mxu0
    %v1146 = vadd.f32 0.0, %v1145
    %v1147 = vpop.f32.mrb[0].mxu0
    %v1148 = vadd.f32 0.0, %v1147
    %v1149 = vpop.f32.mrb[0].mxu0
    %v1150 = vadd.f32 0.0, %v1149
    %1151 = vmatprep.mubr.bf16.mxu0 0
    %1152 = vmatmul.mubr.bf16.gmra.mrb[0].mxu0 %v1045
    %v1153 = vpop.f32.mrb[0].mxu0
    %v1154 = vadd.f32 0.0, %v1153
    %v1155 = vpop.f32.mrb[0].mxu0
    %v1156 = vadd.f32 0.0, %v1155
    %v1157 = vpop.f32.mrb[0].mxu0
    %v1158 = vadd.f32 0.0, %v1157
    %v1159 = vpop.f32.mrb[0].mxu0
    %v1160 = vadd.f32 0.0, %v1159
    %1161 = vmatprep.mubr.bf16.mxu0 0
    %1162 = vmatmul.mubr.bf16.gmra.mrb[0].mxu0 %v1048
    %v1163 = vpop.f32.mrb[0].mxu0
    %v1164 = vadd.f32 0.0, %v1163
    %v1165 = vpop.f32.mrb[0].mxu0
    %v1166 = vadd.f32 0.0, %v1165
    %v1167 = vpop.f32.mrb[0].mxu0
    %v1168 = vadd.f32 0.0, %v1167
    %v1169 = vpop.f32.mrb[0].mxu0
    %v1170 = vadd.f32 0.0, %v1169
    %1171 = vmatprep.mubr.bf16.mxu0 0
    %1172 = vmatmul.mubr.bf16.gmra.mrb[0].mxu0 %v1051
    %v1173 = vpop.f32.mrb[0].mxu0
    %v1174 = vadd.f32 0.0, %v1173
    %v1175 = vpop.f32.mrb[0].mxu0
    %v1176 = vadd.f32 0.0, %v1175
    %v1177 = vpop.f32.mrb[0].mxu0
    %v1178 = vadd.f32 0.0, %v1177
    %v1179 = vpop.f32.mrb[0].mxu0
    %v1180 = vadd.f32 0.0, %v1179
    %1181 = vmatprep.mubr.bf16.mxu0 0
    %1182 = vmatmul.mubr.bf16.gmra.mrb[0].mxu0 %v1054
    %v1183 = vpop.f32.mrb[0].mxu0
    %v1184 = vadd.f32 0.0, %v1183
    %v1185 = vpop.f32.mrb[0].mxu0
    %v1186 = vadd.f32 0.0, %v1185
    %v1187 = vpop.f32.mrb[0].mxu0
    %v1188 = vadd.f32 0.0, %v1187
    %v1189 = vpop.f32.mrb[0].mxu0
    %v1190 = vadd.f32 0.0, %v1189
    %1191 = vmatprep.mubr.bf16.mxu0 0
    %1192 = vmatmul.mubr.bf16.gmra.mrb[0].mxu0 %v1057
    %v1193 = vpop.f32.mrb[0].mxu0
    %v1194 = vadd.f32 0.0, %v1193
    %v1195 = vpop.f32.mrb[0].mxu0
    %v1196 = vadd.f32 0.0, %v1195
    %v1197 = vpop.f32.mrb[0].mxu0
    %v1198 = vadd.f32 0.0, %v1197
    %v1199 = vpop.f32.mrb[0].mxu0
    %v1200 = vadd.f32 0.0, %v1199
    %1201 = vmatprep.mubr.bf16.mxu0 0
    %1202 = vmatmul.mubr.bf16.gmra.mrb[0].mxu0 %v1060
    %v1203 = vpop.f32.mrb[0].mxu0
    %v1204 = vadd.f32 0.0, %v1203
    %v1205 = vpop.f32.mrb[0].mxu0
    %v1206 = vadd.f32 0.0, %v1205
    %v1207 = vpop.f32.mrb[0].mxu0
    %v1208 = vadd.f32 0.0, %v1207
    %v1209 = vpop.f32.mrb[0].mxu0
    %v1210 = vadd.f32 0.0, %v1209
    %1211 = vmatprep.mubr.bf16.mxu0 0
    %1212 = vmatmul.mubr.bf16.gmra.mrb[0].mxu0 %v1063
    %v1213 = vpop.f32.mrb[0].mxu0
    %v1214 = vadd.f32 0.0, %v1213
    %v1215 = vpop.f32.mrb[0].mxu0
    %v1216 = vadd.f32 0.0, %v1215
    %v1217 = vpop.f32.mrb[0].mxu0
    %v1218 = vadd.f32 0.0, %v1217
    %v1219 = vpop.f32.mrb[0].mxu0
    %v1220 = vadd.f32 0.0, %v1219
    %1221 = vmatprep.mubr.bf16.mxu0 0
    %1222 = vmatmul.mubr.bf16.gmra.mrb[0].mxu0 %v1066
    %v1223 = vpop.f32.mrb[0].mxu0
    %v1224 = vadd.f32 0.0, %v1223
    %v1225 = vpop.f32.mrb[0].mxu0
    %v1226 = vadd.f32 0.0, %v1225
    %v1227 = vpop.f32.mrb[0].mxu0
    %v1228 = vadd.f32 0.0, %v1227
    %v1229 = vpop.f32.mrb[0].mxu0
    %v1230 = vadd.f32 0.0, %v1229
    %1231 = vmatprep.mubr.bf16.mxu0 0
    %1232 = vmatmul.mubr.bf16.gmra.mrb[0].mxu0 %v1069
    %v1233 = vpop.f32.mrb[0].mxu0
    %v1234 = vadd.f32 0.0, %v1233
    %v1235 = vpop.f32.mrb[0].mxu0
    %v1236 = vadd.f32 0.0, %v1235
    %v1237 = vpop.f32.mrb[0].mxu0
    %v1238 = vadd.f32 0.0, %v1237
    %v1239 = vpop.f32.mrb[0].mxu0
    %v1240 = vadd.f32 0.0, %v1239
    %1241 = vmatprep.mubr.bf16.mxu0 0
    %1242 = vmatmul.mubr.bf16.gmra.mrb[0].mxu0 %v1072
    %v1243 = vpop.f32.mrb[0].mxu0
    %v1244 = vadd.f32 0.0, %v1243
    %v1245 = vpop.f32.mrb[0].mxu0
    %v1246 = vadd.f32 0.0, %v1245
    %v1247 = vpop.f32.mrb[0].mxu0
    %v1248 = vadd.f32 0.0, %v1247
    %v1249 = vpop.f32.mrb[0].mxu0
    %v1250 = vadd.f32 0.0, %v1249
    %1251 = vmatprep.mubr.bf16.mxu0 0
    %1252 = vmatmul.mubr.bf16.gmra.mrb[0].mxu0 %v1075
    %v1253 = vpop.f32.mrb[0].mxu0
    %v1254 = vadd.f32 0.0, %v1253
    %v1255 = vpop.f32.mrb[0].mxu0
    %v1256 = vadd.f32 0.0, %v1255
    %v1257 = vpop.f32.mrb[0].mxu0
    %v1258 = vadd.f32 0.0, %v1257
    %v1259 = vpop.f32.mrb[0].mxu0
    %v1260 = vadd.f32 0.0, %v1259
    %1261 = vmatprep.mubr.bf16.mxu0 0
    %1262 = vmatmul.mubr.bf16.gmra.mrb[0].mxu0 %v1078
    %v1263 = vpop.f32.mrb[0].mxu0
    %v1264 = vadd.f32 0.0, %v1263
    %v1265 = vpop.f32.mrb[0].mxu0
    %v1266 = vadd.f32 0.0, %v1265
    %v1267 = vpop.f32.mrb[0].mxu0
    %v1268 = vadd.f32 0.0, %v1267
    %v1269 = vpop.f32.mrb[0].mxu0
    %v1270 = vadd.f32 0.0, %v1269
    %1271 = vmatprep.mubr.bf16.mxu0 0
    %1272 = vmatmul.mubr.bf16.gmra.mrb[0].mxu0 %v1081
    %v1273 = vpop.f32.mrb[0].mxu0
    %v1274 = vadd.f32 0.0, %v1273
    %v1275 = vpop.f32.mrb[0].mxu0
    %v1276 = vadd.f32 0.0, %v1275
    %v1277 = vpop.f32.mrb[0].mxu0
    %v1278 = vadd.f32 0.0, %v1277
    %v1279 = vpop.f32.mrb[0].mxu0
    %v1280 = vadd.f32 0.0, %v1279
    %1281 = vdwg.mxu0
    %v1282 = vmax.f32 %v1124, %v1126
    %1283 = vmax.xlane.f32.xlu0 %v1282
    %v1284 = vpop.xlane.xlu0 %1283
    %v1285 = vmax.f32 %v1128, %v1130
    %1286 = vmax.xlane.f32.xlu0 %v1285
    %v1287 = vpop.xlane.xlu0 %1286
    %v1288 = vmax.f32 %v1134, %v1136
    %1289 = vmax.xlane.f32.xlu0 %v1288
    %v1290 = vpop.xlane.xlu0 %1289
    %v1291 = vmax.f32 %v1138, %v1140
    %1292 = vmax.xlane.f32.xlu0 %v1291
    %v1293 = vpop.xlane.xlu0 %1292
    %v1294 = vmax.f32 %v1144, %v1146
    %1295 = vmax.xlane.f32.xlu0 %v1294
    %v1296 = vpop.xlane.xlu0 %1295
    %v1297 = vmax.f32 %v1148, %v1150
    %1298 = vmax.xlane.f32.xlu0 %v1297
    %v1299 = vpop.xlane.xlu0 %1298
    %v1300 = vmax.f32 %v1154, %v1156
    %1301 = vmax.xlane.f32.xlu0 %v1300
    %v1302 = vpop.xlane.xlu0 %1301
    %v1303 = vmax.f32 %v1158, %v1160
    %1304 = vmax.xlane.f32.xlu0 %v1303
    %v1305 = vpop.xlane.xlu0 %1304
    %v1306 = vmax.f32 %v1164, %v1166
    %1307 = vmax.xlane.f32.xlu0 %v1306
    %v1308 = vpop.xlane.xlu0 %1307
    %v1309 = vmax.f32 %v1168, %v1170
    %1310 = vmax.xlane.f32.xlu0 %v1309
    %v1311 = vpop.xlane.xlu0 %1310
    %v1312 = vmax.f32 %v1174, %v1176
    %1313 = vmax.xlane.f32.xlu0 %v1312
    %v1314 = vpop.xlane.xlu0 %1313
    %v1315 = vmax.f32 %v1178, %v1180
    %1316 = vmax.xlane.f32.xlu0 %v1315
    %v1317 = vpop.xlane.xlu0 %1316
    %v1318 = vmax.f32 %v1184, %v1186
    %1319 = vmax.xlane.f32.xlu0 %v1318
    %v1320 = vpop.xlane.xlu0 %1319
    %v1321 = vmax.f32 %v1188, %v1190
    %1322 = vmax.xlane.f32.xlu0 %v1321
    %v1323 = vpop.xlane.xlu0 %1322
    %v1324 = vmax.f32 %v1194, %v1196
    %1325 = vmax.xlane.f32.xlu0 %v1324
    %v1326 = vpop.xlane.xlu0 %1325
    %v1327 = vmax.f32 %v1198, %v1200
    %1328 = vmax.xlane.f32.xlu0 %v1327
    %v1329 = vpop.xlane.xlu0 %1328
    %v1330 = vmax.f32 %v1204, %v1206
    %1331 = vmax.xlane.f32.xlu0 %v1330
    %v1332 = vpop.xlane.xlu0 %1331
    %v1333 = vmax.f32 %v1208, %v1210
    %1334 = vmax.xlane.f32.xlu0 %v1333
    %v1335 = vpop.xlane.xlu0 %1334
    %v1336 = vmax.f32 %v1214, %v1216
    %1337 = vmax.xlane.f32.xlu0 %v1336
    %v1338 = vpop.xlane.xlu0 %1337
    %v1339 = vmax.f32 %v1218, %v1220
    %1340 = vmax.xlane.f32.xlu0 %v1339
    %v1341 = vpop.xlane.xlu0 %1340
    %v1342 = vmax.f32 %v1224, %v1226
    %1343 = vmax.xlane.f32.xlu0 %v1342
    %v1344 = vpop.xlane.xlu0 %1343
    %v1345 = vmax.f32 %v1228, %v1230
    %1346 = vmax.xlane.f32.xlu0 %v1345
    %v1347 = vpop.xlane.xlu0 %1346
    %v1348 = vmax.f32 %v1234, %v1236
    %1349 = vmax.xlane.f32.xlu0 %v1348
    %v1350 = vpop.xlane.xlu0 %1349
    %v1351 = vmax.f32 %v1238, %v1240
    %1352 = vmax.xlane.f32.xlu0 %v1351
    %v1353 = vpop.xlane.xlu0 %1352
    %v1354 = vmax.f32 %v1244, %v1246
    %1355 = vmax.xlane.f32.xlu0 %v1354
    %v1356 = vpop.xlane.xlu0 %1355
    %v1357 = vmax.f32 %v1248, %v1250
    %1358 = vmax.xlane.f32.xlu0 %v1357
    %v1359 = vpop.xlane.xlu0 %1358
    %v1360 = vmax.f32 %v1254, %v1256
    %1361 = vmax.xlane.f32.xlu0 %v1360
    %v1362 = vpop.xlane.xlu0 %1361
    %v1363 = vmax.f32 %v1258, %v1260
    %1364 = vmax.xlane.f32.xlu0 %v1363
    %v1365 = vpop.xlane.xlu0 %1364
    %v1366 = vmax.f32 %v1264, %v1266
    %1367 = vmax.xlane.f32.xlu0 %v1366
    %v1368 = vpop.xlane.xlu0 %1367
    %v1369 = vmax.f32 %v1268, %v1270
    %1370 = vmax.xlane.f32.xlu0 %v1369
    %v1371 = vpop.xlane.xlu0 %1370
    %v1372 = vmax.f32 %v1274, %v1276
    %1373 = vmax.xlane.f32.xlu0 %v1372
    %v1374 = vpop.xlane.xlu0 %1373
    %v1375 = vmax.f32 %v1278, %v1280
    %1376 = vmax.xlane.f32.xlu0 %v1375
    %v1377 = vpop.xlane.xlu0 %1376
    %v1378 = vsub.f32 %v1124, %v1284
    %v1379 = vsub.f32 %v1126, %v1284
    %v1380 = vsub.f32 %v1128, %v1287
    %v1381 = vsub.f32 %v1130, %v1287
    %v1382 = vsub.f32 %v1134, %v1290
    %v1383 = vsub.f32 %v1136, %v1290
    %v1384 = vsub.f32 %v1138, %v1293
    %v1385 = vsub.f32 %v1140, %v1293
    %v1386 = vsub.f32 %v1144, %v1296
    %v1387 = vsub.f32 %v1146, %v1296
    %v1388 = vsub.f32 %v1148, %v1299
    %v1389 = vsub.f32 %v1150, %v1299
    %v1390 = vsub.f32 %v1154, %v1302
    %v1391 = vsub.f32 %v1156, %v1302
    %v1392 = vsub.f32 %v1158, %v1305
    %v1393 = vsub.f32 %v1160, %v1305
    %v1394 = vsub.f32 %v1164, %v1308
    %v1395 = vsub.f32 %v1166, %v1308
    %v1396 = vsub.f32 %v1168, %v1311
    %v1397 = vsub.f32 %v1170, %v1311
    %v1398 = vsub.f32 %v1174, %v1314
    %v1399 = vsub.f32 %v1176, %v1314
    %v1400 = vsub.f32 %v1178, %v1317
    %v1401 = vsub.f32 %v1180, %v1317
    %v1402 = vsub.f32 %v1184, %v1320
    %v1403 = vsub.f32 %v1186, %v1320
    %v1404 = vsub.f32 %v1188, %v1323
    %v1405 = vsub.f32 %v1190, %v1323
    %v1406 = vsub.f32 %v1194, %v1326
    %v1407 = vsub.f32 %v1196, %v1326
    %v1408 = vsub.f32 %v1198, %v1329
    %v1409 = vsub.f32 %v1200, %v1329
    %v1410 = vsub.f32 %v1204, %v1332
    %v1411 = vsub.f32 %v1206, %v1332
    %v1412 = vsub.f32 %v1208, %v1335
    %v1413 = vsub.f32 %v1210, %v1335
    %v1414 = vsub.f32 %v1214, %v1338
    %v1415 = vsub.f32 %v1216, %v1338
    %v1416 = vsub.f32 %v1218, %v1341
    %v1417 = vsub.f32 %v1220, %v1341
    %v1418 = vsub.f32 %v1224, %v1344
    %v1419 = vsub.f32 %v1226, %v1344
    %v1420 = vsub.f32 %v1228, %v1347
    %v1421 = vsub.f32 %v1230, %v1347
    %v1422 = vsub.f32 %v1234, %v1350
    %v1423 = vsub.f32 %v1236, %v1350
    %v1424 = vsub.f32 %v1238, %v1353
    %v1425 = vsub.f32 %v1240, %v1353
    %v1426 = vsub.f32 %v1244, %v1356
    %v1427 = vsub.f32 %v1246, %v1356
    %v1428 = vsub.f32 %v1248, %v1359
    %v1429 = vsub.f32 %v1250, %v1359
    %v1430 = vsub.f32 %v1254, %v1362
    %v1431 = vsub.f32 %v1256, %v1362
    %v1432 = vsub.f32 %v1258, %v1365
    %v1433 = vsub.f32 %v1260, %v1365
    %v1434 = vsub.f32 %v1264, %v1368
    %v1435 = vsub.f32 %v1266, %v1368
    %v1436 = vsub.f32 %v1268, %v1371
    %v1437 = vsub.f32 %v1270, %v1371
    %v1438 = vsub.f32 %v1274, %v1374
    %v1439 = vsub.f32 %v1276, %v1374
    %v1440 = vsub.f32 %v1278, %v1377
    %v1441 = vsub.f32 %v1280, %v1377
    %v1442 = vmul.f32 %v1378, 1.442695
    %v1443 = vpow.pop %v1442
    %v1444 = vmul.f32 %v1379, 1.442695
    %v1445 = vpow.pop %v1444
    %v1446 = vmul.f32 %v1380, 1.442695
    %v1447 = vpow.pop %v1446
    %v1448 = vmul.f32 %v1381, 1.442695
    %v1449 = vpow.pop %v1448
    %v1450 = vmul.f32 %v1382, 1.442695
    %v1451 = vpow.pop %v1450
    %v1452 = vmul.f32 %v1383, 1.442695
    %v1453 = vpow.pop %v1452
    %v1454 = vmul.f32 %v1384, 1.442695
    %v1455 = vpow.pop %v1454
    %v1456 = vmul.f32 %v1385, 1.442695
    %v1457 = vpow.pop %v1456
    %v1458 = vmul.f32 %v1386, 1.442695
    %v1459 = vpow.pop %v1458
    %v1460 = vmul.f32 %v1387, 1.442695
    %v1461 = vpow.pop %v1460
    %v1462 = vmul.f32 %v1388, 1.442695
    %v1463 = vpow.pop %v1462
    %v1464 = vmul.f32 %v1389, 1.442695
    %v1465 = vpow.pop %v1464
    %v1466 = vmul.f32 %v1390, 1.442695
    %v1467 = vpow.pop %v1466
    %v1468 = vmul.f32 %v1391, 1.442695
    %v1469 = vpow.pop %v1468
    %v1470 = vmul.f32 %v1392, 1.442695
    %v1471 = vpow.pop %v1470
    %v1472 = vmul.f32 %v1393, 1.442695
    %v1473 = vpow.pop %v1472
    %v1474 = vmul.f32 %v1394, 1.442695
    %v1475 = vpow.pop %v1474
    %v1476 = vmul.f32 %v1395, 1.442695
    %v1477 = vpow.pop %v1476
    %v1478 = vmul.f32 %v1396, 1.442695
    %v1479 = vpow.pop %v1478
    %v1480 = vmul.f32 %v1397, 1.442695
    %v1481 = vpow.pop %v1480
    %v1482 = vmul.f32 %v1398, 1.442695
    %v1483 = vpow.pop %v1482
    %v1484 = vmul.f32 %v1399, 1.442695
    %v1485 = vpow.pop %v1484
    %v1486 = vmul.f32 %v1400, 1.442695
    %v1487 = vpow.pop %v1486
    %v1488 = vmul.f32 %v1401, 1.442695
    %v1489 = vpow.pop %v1488
    %v1490 = vmul.f32 %v1402, 1.442695
    %v1491 = vpow.pop %v1490
    %v1492 = vmul.f32 %v1403, 1.442695
    %v1493 = vpow.pop %v1492
    %v1494 = vmul.f32 %v1404, 1.442695
    %v1495 = vpow.pop %v1494
    %v1496 = vmul.f32 %v1405, 1.442695
    %v1497 = vpow.pop %v1496
    %v1498 = vmul.f32 %v1406, 1.442695
    %v1499 = vpow.pop %v1498
    %v1500 = vmul.f32 %v1407, 1.442695
    %v1501 = vpow.pop %v1500
    %v1502 = vmul.f32 %v1408, 1.442695
    %v1503 = vpow.pop %v1502
    %v1504 = vmul.f32 %v1409, 1.442695
    %v1505 = vpow.pop %v1504
    %v1506 = vmul.f32 %v1410, 1.442695
    %v1507 = vpow.pop %v1506
    %v1508 = vmul.f32 %v1411, 1.442695
    %v1509 = vpow.pop %v1508
    %v1510 = vmul.f32 %v1412, 1.442695
    %v1511 = vpow.pop %v1510
    %v1512 = vmul.f32 %v1413, 1.442695
    %v1513 = vpow.pop %v1512
    %v1514 = vmul.f32 %v1414, 1.442695
    %v1515 = vpow.pop %v1514
    %v1516 = vmul.f32 %v1415, 1.442695
    %v1517 = vpow.pop %v1516
    %v1518 = vmul.f32 %v1416, 1.442695
    %v1519 = vpow.pop %v1518
    %v1520 = vmul.f32 %v1417, 1.442695
    %v1521 = vpow.pop %v1520
    %v1522 = vmul.f32 %v1418, 1.442695
    %v1523 = vpow.pop %v1522
    %v1524 = vmul.f32 %v1419, 1.442695
    %v1525 = vpow.pop %v1524
    %v1526 = vmul.f32 %v1420, 1.442695
    %v1527 = vpow.pop %v1526
    %v1528 = vmul.f32 %v1421, 1.442695
    %v1529 = vpow.pop %v1528
    %v1530 = vmul.f32 %v1422, 1.442695
    %v1531 = vpow.pop %v1530
    %v1532 = vmul.f32 %v1423, 1.442695
    %v1533 = vpow.pop %v1532
    %v1534 = vmul.f32 %v1424, 1.442695
    %v1535 = vpow.pop %v1534
    %v1536 = vmul.f32 %v1425, 1.442695
    %v1537 = vpow.pop %v1536
    %v1538 = vmul.f32 %v1426, 1.442695
    %v1539 = vpow.pop %v1538
    %v1540 = vmul.f32 %v1427, 1.442695
    %v1541 = vpow.pop %v1540
    %v1542 = vmul.f32 %v1428, 1.442695
    %v1543 = vpow.pop %v1542
    %v1544 = vmul.f32 %v1429, 1.442695
    %v1545 = vpow.pop %v1544
    %v1546 = vmul.f32 %v1430, 1.442695
    %v1547 = vpow.pop %v1546
    %v1548 = vmul.f32 %v1431, 1.442695
    %v1549 = vpow.pop %v1548
    %v1550 = vmul.f32 %v1432, 1.442695
    %v1551 = vpow.pop %v1550
    %v1552 = vmul.f32 %v1433, 1.442695
    %v1553 = vpow.pop %v1552
    %v1554 = vmul.f32 %v1434, 1.442695
    %v1555 = vpow.pop %v1554
    %v1556 = vmul.f32 %v1435, 1.442695
    %v1557 = vpow.pop %v1556
    %v1558 = vmul.f32 %v1436, 1.442695
    %v1559 = vpow.pop %v1558
    %v1560 = vmul.f32 %v1437, 1.442695
    %v1561 = vpow.pop %v1560
    %v1562 = vmul.f32 %v1438, 1.442695
    %v1563 = vpow.pop %v1562
    %v1564 = vmul.f32 %v1439, 1.442695
    %v1565 = vpow.pop %v1564
    %v1566 = vmul.f32 %v1440, 1.442695
    %v1567 = vpow.pop %v1566
    %v1568 = vmul.f32 %v1441, 1.442695
    %v1569 = vpow.pop %v1568
    %v1570 = vadd.f32 %v1443, %v1445
    %1571 = vadd.xlane.f32.xlu0 %v1570
    %v1572 = vpop.xlane.xlu0 %1571
    %v1573 = vadd.f32 %v1447, %v1449
    %1574 = vadd.xlane.f32.xlu0 %v1573
    %v1575 = vpop.xlane.xlu0 %1574
    %v1576 = vadd.f32 %v1451, %v1453
    %1577 = vadd.xlane.f32.xlu0 %v1576
    %v1578 = vpop.xlane.xlu0 %1577
    %v1579 = vadd.f32 %v1455, %v1457
    %1580 = vadd.xlane.f32.xlu0 %v1579
    %v1581 = vpop.xlane.xlu0 %1580
    %v1582 = vadd.f32 %v1459, %v1461
    %1583 = vadd.xlane.f32.xlu0 %v1582
    %v1584 = vpop.xlane.xlu0 %1583
    %v1585 = vadd.f32 %v1463, %v1465
    %1586 = vadd.xlane.f32.xlu0 %v1585
    %v1587 = vpop.xlane.xlu0 %1586
    %v1588 = vadd.f32 %v1467, %v1469
    %1589 = vadd.xlane.f32.xlu0 %v1588
    %v1590 = vpop.xlane.xlu0 %1589
    %v1591 = vadd.f32 %v1471, %v1473
    %1592 = vadd.xlane.f32.xlu0 %v1591
    %v1593 = vpop.xlane.xlu0 %1592
    %v1594 = vadd.f32 %v1475, %v1477
    %1595 = vadd.xlane.f32.xlu0 %v1594
    %v1596 = vpop.xlane.xlu0 %1595
    %v1597 = vadd.f32 %v1479, %v1481
    %1598 = vadd.xlane.f32.xlu0 %v1597
    %v1599 = vpop.xlane.xlu0 %1598
    %v1600 = vadd.f32 %v1483, %v1485
    %1601 = vadd.xlane.f32.xlu0 %v1600
    %v1602 = vpop.xlane.xlu0 %1601
    %v1603 = vadd.f32 %v1487, %v1489
    %1604 = vadd.xlane.f32.xlu0 %v1603
    %v1605 = vpop.xlane.xlu0 %1604
    %v1606 = vadd.f32 %v1491, %v1493
    %1607 = vadd.xlane.f32.xlu0 %v1606
    %v1608 = vpop.xlane.xlu0 %1607
    %v1609 = vadd.f32 %v1495, %v1497
    %1610 = vadd.xlane.f32.xlu0 %v1609
    %v1611 = vpop.xlane.xlu0 %1610
    %v1612 = vadd.f32 %v1499, %v1501
    %1613 = vadd.xlane.f32.xlu0 %v1612
    %v1614 = vpop.xlane.xlu0 %1613
    %v1615 = vadd.f32 %v1503, %v1505
    %1616 = vadd.xlane.f32.xlu0 %v1615
    %v1617 = vpop.xlane.xlu0 %1616
    %v1618 = vadd.f32 %v1507, %v1509
    %1619 = vadd.xlane.f32.xlu0 %v1618
    %v1620 = vpop.xlane.xlu0 %1619
    %v1621 = vadd.f32 %v1511, %v1513
    %1622 = vadd.xlane.f32.xlu0 %v1621
    %v1623 = vpop.xlane.xlu0 %1622
    %v1624 = vadd.f32 %v1515, %v1517
    %1625 = vadd.xlane.f32.xlu0 %v1624
    %v1626 = vpop.xlane.xlu0 %1625
    %v1627 = vadd.f32 %v1519, %v1521
    %1628 = vadd.xlane.f32.xlu0 %v1627
    %v1629 = vpop.xlane.xlu0 %1628
    %v1630 = vadd.f32 %v1523, %v1525
    %1631 = vadd.xlane.f32.xlu0 %v1630
    %v1632 = vpop.xlane.xlu0 %1631
    %v1633 = vadd.f32 %v1527, %v1529
    %1634 = vadd.xlane.f32.xlu0 %v1633
    %v1635 = vpop.xlane.xlu0 %1634
    %v1636 = vadd.f32 %v1531, %v1533
    %1637 = vadd.xlane.f32.xlu0 %v1636
    %v1638 = vpop.xlane.xlu0 %1637
    %v1639 = vadd.f32 %v1535, %v1537
    %1640 = vadd.xlane.f32.xlu0 %v1639
    %v1641 = vpop.xlane.xlu0 %1640
    %v1642 = vadd.f32 %v1539, %v1541
    %1643 = vadd.xlane.f32.xlu0 %v1642
    %v1644 = vpop.xlane.xlu0 %1643
    %v1645 = vadd.f32 %v1543, %v1545
    %1646 = vadd.xlane.f32.xlu0 %v1645
    %v1647 = vpop.xlane.xlu0 %1646
    %v1648 = vadd.f32 %v1547, %v1549
    %1649 = vadd.xlane.f32.xlu0 %v1648
    %v1650 = vpop.xlane.xlu0 %1649
    %v1651 = vadd.f32 %v1551, %v1553
    %1652 = vadd.xlane.f32.xlu0 %v1651
    %v1653 = vpop.xlane.xlu0 %1652
    %v1654 = vadd.f32 %v1555, %v1557
    %1655 = vadd.xlane.f32.xlu0 %v1654
    %v1656 = vpop.xlane.xlu0 %1655
    %v1657 = vadd.f32 %v1559, %v1561
    %1658 = vadd.xlane.f32.xlu0 %v1657
    %v1659 = vpop.xlane.xlu0 %1658
    %v1660 = vadd.f32 %v1563, %v1565
    %1661 = vadd.xlane.f32.xlu0 %v1660
    %v1662 = vpop.xlane.xlu0 %1661
    %v1663 = vadd.f32 %v1567, %v1569
    %1664 = vadd.xlane.f32.xlu0 %v1663
    %v1665 = vpop.xlane.xlu0 %1664
    %v1666 = vrcp.pop %v1572
    %v1667 = vrcp.pop %v1575
    %v1668 = vrcp.pop %v1578
    %v1669 = vrcp.pop %v1581
    %v1670 = vrcp.pop %v1584
    %v1671 = vrcp.pop %v1587
    %v1672 = vrcp.pop %v1590
    %v1673 = vrcp.pop %v1593
    %v1674 = vrcp.pop %v1596
    %v1675 = vrcp.pop %v1599
    %v1676 = vrcp.pop %v1602
    %v1677 = vrcp.pop %v1605
    %v1678 = vrcp.pop %v1608
    %v1679 = vrcp.pop %v1611
    %v1680 = vrcp.pop %v1614
    %v1681 = vrcp.pop %v1617
    %v1682 = vrcp.pop %v1620
    %v1683 = vrcp.pop %v1623
    %v1684 = vrcp.pop %v1626
    %v1685 = vrcp.pop %v1629
    %v1686 = vrcp.pop %v1632
    %v1687 = vrcp.pop %v1635
    %v1688 = vrcp.pop %v1638
    %v1689 = vrcp.pop %v1641
    %v1690 = vrcp.pop %v1644
    %v1691 = vrcp.pop %v1647
    %v1692 = vrcp.pop %v1650
    %v1693 = vrcp.pop %v1653
    %v1694 = vrcp.pop %v1656
    %v1695 = vrcp.pop %v1659
    %v1696 = vrcp.pop %v1662
    %v1697 = vrcp.pop %v1665
    %v1698 = vmul.f32 %v1443, %v1666
    %v1699 = vmul.f32 %v1445, %v1666
    %v1700 = vmul.f32 %v1447, %v1667
    %v1701 = vmul.f32 %v1449, %v1667
    %v1702 = vmul.f32 %v1451, %v1668
    %v1703 = vmul.f32 %v1453, %v1668
    %v1704 = vmul.f32 %v1455, %v1669
    %v1705 = vmul.f32 %v1457, %v1669
    %v1706 = vmul.f32 %v1459, %v1670
    %v1707 = vmul.f32 %v1461, %v1670
    %v1708 = vmul.f32 %v1463, %v1671
    %v1709 = vmul.f32 %v1465, %v1671
    %v1710 = vmul.f32 %v1467, %v1672
    %v1711 = vmul.f32 %v1469, %v1672
    %v1712 = vmul.f32 %v1471, %v1673
    %v1713 = vmul.f32 %v1473, %v1673
    %v1714 = vmul.f32 %v1475, %v1674
    %v1715 = vmul.f32 %v1477, %v1674
    %v1716 = vmul.f32 %v1479, %v1675
    %v1717 = vmul.f32 %v1481, %v1675
    %v1718 = vmul.f32 %v1483, %v1676
    %v1719 = vmul.f32 %v1485, %v1676
    %v1720 = vmul.f32 %v1487, %v1677
    %v1721 = vmul.f32 %v1489, %v1677
    %v1722 = vmul.f32 %v1491, %v1678
    %v1723 = vmul.f32 %v1493, %v1678
    %v1724 = vmul.f32 %v1495, %v1679
    %v1725 = vmul.f32 %v1497, %v1679
    %v1726 = vmul.f32 %v1499, %v1680
    %v1727 = vmul.f32 %v1501, %v1680
    %v1728 = vmul.f32 %v1503, %v1681
    %v1729 = vmul.f32 %v1505, %v1681
    %v1730 = vmul.f32 %v1507, %v1682
    %v1731 = vmul.f32 %v1509, %v1682
    %v1732 = vmul.f32 %v1511, %v1683
    %v1733 = vmul.f32 %v1513, %v1683
    %v1734 = vmul.f32 %v1515, %v1684
    %v1735 = vmul.f32 %v1517, %v1684
    %v1736 = vmul.f32 %v1519, %v1685
    %v1737 = vmul.f32 %v1521, %v1685
    %v1738 = vmul.f32 %v1523, %v1686
    %v1739 = vmul.f32 %v1525, %v1686
    %v1740 = vmul.f32 %v1527, %v1687
    %v1741 = vmul.f32 %v1529, %v1687
    %v1742 = vmul.f32 %v1531, %v1688
    %v1743 = vmul.f32 %v1533, %v1688
    %v1744 = vmul.f32 %v1535, %v1689
    %v1745 = vmul.f32 %v1537, %v1689
    %v1746 = vmul.f32 %v1539, %v1690
    %v1747 = vmul.f32 %v1541, %v1690
    %v1748 = vmul.f32 %v1543, %v1691
    %v1749 = vmul.f32 %v1545, %v1691
    %v1750 = vmul.f32 %v1547, %v1692
    %v1751 = vmul.f32 %v1549, %v1692
    %v1752 = vmul.f32 %v1551, %v1693
    %v1753 = vmul.f32 %v1553, %v1693
    %v1754 = vmul.f32 %v1555, %v1694
    %v1755 = vmul.f32 %v1557, %v1694
    %v1756 = vmul.f32 %v1559, %v1695
    %v1757 = vmul.f32 %v1561, %v1695
    %v1758 = vmul.f32 %v1563, %v1696
    %v1759 = vmul.f32 %v1565, %v1696
    %v1760 = vmul.f32 %v1567, %v1697
    %v1761 = vmul.f32 %v1569, %v1697
    %v1762 = vpack.c.bf16 %v1700, %v1698
    %v1763 = vpack.c.bf16 %v1701, %v1699
    %v1764 = vpack.c.bf16 %v1704, %v1702
    %v1765 = vpack.c.bf16 %v1705, %v1703
    %v1766 = vpack.c.bf16 %v1708, %v1706
    %v1767 = vpack.c.bf16 %v1709, %v1707
    %v1768 = vpack.c.bf16 %v1712, %v1710
    %v1769 = vpack.c.bf16 %v1713, %v1711
    %v1770 = vpack.c.bf16 %v1716, %v1714
    %v1771 = vpack.c.bf16 %v1717, %v1715
    %v1772 = vpack.c.bf16 %v1720, %v1718
    %v1773 = vpack.c.bf16 %v1721, %v1719
    %v1774 = vpack.c.bf16 %v1724, %v1722
    %v1775 = vpack.c.bf16 %v1725, %v1723
    %v1776 = vpack.c.bf16 %v1728, %v1726
    %v1777 = vpack.c.bf16 %v1729, %v1727
    %v1778 = vpack.c.bf16 %v1732, %v1730
    %v1779 = vpack.c.bf16 %v1733, %v1731
    %v1780 = vpack.c.bf16 %v1736, %v1734
    %v1781 = vpack.c.bf16 %v1737, %v1735
    %v1782 = vpack.c.bf16 %v1740, %v1738
    %v1783 = vpack.c.bf16 %v1741, %v1739
    %v1784 = vpack.c.bf16 %v1744, %v1742
    %v1785 = vpack.c.bf16 %v1745, %v1743
    %v1786 = vpack.c.bf16 %v1748, %v1746
    %v1787 = vpack.c.bf16 %v1749, %v1747
    %v1788 = vpack.c.bf16 %v1752, %v1750
    %v1789 = vpack.c.bf16 %v1753, %v1751
    %v1790 = vpack.c.bf16 %v1756, %v1754
    %v1791 = vpack.c.bf16 %v1757, %v1755
    %v1792 = vpack.c.bf16 %v1760, %v1758
    %v1793 = vpack.c.bf16 %v1761, %v1759
    %1794 = vmatprep.subr.bf16.mxu0 %v1763
    %1795 = vmatpush1.bf16.msra.mxu0 %v1762
    %1796 = vmatprep.subr.bf16.mxu0 %v1765
    %1797 = vmatpush1.bf16.msra.mxu0 %v1764
    %1798 = vmatprep.subr.bf16.mxu0 %v1767
    %1799 = vmatpush1.bf16.msra.mxu0 %v1766
    %1800 = vmatprep.subr.bf16.mxu0 %v1769
    %1801 = vmatpush1.bf16.msra.mxu0 %v1768
    %1802 = vmatprep.subr.bf16.mxu0 %v1771
    %1803 = vmatpush1.bf16.msra.mxu0 %v1770
    %1804 = vmatprep.subr.bf16.mxu0 %v1773
    %1805 = vmatpush1.bf16.msra.mxu0 %v1772
    %1806 = vmatprep.subr.bf16.mxu0 %v1775
    %1807 = vmatpush1.bf16.msra.mxu0 %v1774
    %1808 = vmatprep.subr.bf16.mxu0 %v1777
    %1809 = vmatpush1.bf16.msra.mxu0 %v1776
    %1810 = vmatprep.subr.bf16.mxu0 %v1779
    %1811 = vmatpush1.bf16.msra.mxu0 %v1778
    %1812 = vmatprep.subr.bf16.mxu0 %v1781
    %1813 = vmatpush1.bf16.msra.mxu0 %v1780
    %1814 = vmatprep.subr.bf16.mxu0 %v1783
    %1815 = vmatpush1.bf16.msra.mxu0 %v1782
    %1816 = vmatprep.subr.bf16.mxu0 %v1785
    %1817 = vmatpush1.bf16.msra.mxu0 %v1784
    %1818 = vmatprep.subr.bf16.mxu0 %v1787
    %1819 = vmatpush1.bf16.msra.mxu0 %v1786
    %1820 = vmatprep.subr.bf16.mxu0 %v1789
    %1821 = vmatpush1.bf16.msra.mxu0 %v1788
    %1822 = vmatprep.subr.bf16.mxu0 %v1791
    %1823 = vmatpush1.bf16.msra.mxu0 %v1790
    %1824 = vmatprep.subr.bf16.mxu0 %v1793
    %1825 = vmatpush1.bf16.msra.mxu0 %v1792
    %1826 = vmatprep.mubr.bf16.mxu0 %v996
    %1827 = vmatmul.mubr.bf16.gmra.mrb[0].mxu0 %v995
    %v1828 = vpop.f32.mrb[0].mxu0
    %v1829 = vadd.f32 %v17, %v1828
    %v1830 = vpop.f32.mrb[0].mxu0
    %v1831 = vadd.f32 %v26, %v1830
    %v1832 = vpop.f32.mrb[0].mxu0
    %v1833 = vpop.f32.mrb[0].mxu0
    %1834 = vdwg.mxu0
    %v1837 = vcombine.low %v1829, %v1831
    %1839 = vst [vmem:[#allocation2 + $0x8] sm:$0xff] %v1837
    // Predicated region
    $region14: #{tpu_custom_call.1} parent=1 // pred_check
      _
    $region15: #{tpu_custom_call.1} parent=1 // pred_check_branch
      %1841 = sbr.rel (0) target = $region17
    $region16: #{tpu_custom_call.1} parent=1 // pred_region
      %s1843 = ssub.s32 256, 256
      %1844 = vsyncadd [#allocation3], %s1843
      %s1846 = sshll.u32 [#allocation2], 4
      %s1847 = int_to_ptr.vmem [resolvable:$true] %s1846
      %1849 = dma.vmem_to_hbm [thread:$0]  %s1847, 256, %s3, [#allocation3]
    $region17: #{tpu_custom_call.1} parent=1 // pred_fallthru
      _
    // Predicated region
    $region18: #{tpu_custom_call.1} parent=1 // pred_check
      _
    $region19: #{tpu_custom_call.1} parent=1 // pred_check_branch
      %1851 = sbr.rel (0) target = $region21
    $region20: #{tpu_custom_call.1} parent=1 // pred_region
      %1852 = dma.done [#allocation3], 256
    $region21: #{tpu_custom_call.1} parent=1 // pred_fallthru
      _
    %1853 = vsyncpa [#allocation3], 1

</llo_original>
